<compile_context>
chip_gen: v7x
topology: tpu7x:2x2x1
jax: 0.10.0
libtpu: 0.0.40
codegen_flags: <defaults>
</compile_context>

<pallas_src>
import math
import functools

import jax
import jax.numpy as jnp
from jax import lax
from jax.experimental import pallas as pl
from jax.experimental.pallas import tpu as pltpu


def _mha_kernel(*refs, head, d_k, scale, has_mask):
    if has_mask:
        q_ref, k_ref, v_ref, w_ref, b_ref, mask_ref, o_ref = refs
    else:
        q_ref, k_ref, v_ref, w_ref, b_ref, o_ref = refs
        mask_ref = None

    f32 = jnp.float32
    S = q_ref.shape[1]
    E = q_ref.shape[2]

    x_q = q_ref[0]          # (S, E)
    x_k = k_ref[0]
    x_v = v_ref[0]

    # QKV projections on the MXU (f32 accumulation), bias add on the VPU.
    qp = jnp.dot(x_q, w_ref[0], preferred_element_type=f32) + b_ref[0]
    kp = jnp.dot(x_k, w_ref[1], preferred_element_type=f32) + b_ref[1]
    vp = jnp.dot(x_v, w_ref[2], preferred_element_type=f32) + b_ref[2]

    wo = w_ref[3]           # (E, E) output projection, applied per head-slice below
    if has_mask:
        m0 = mask_ref[0] == 0          # (S, S) True where masked out

    # Per-head scaled-dot-product attention. The output projection is folded
    # into the head loop:  out = sum_h ctx_h @ Wo[h*d_k:(h+1)*d_k, :]
    acc = jnp.zeros((S, E), dtype=f32)
    for h in range(head):              # static unroll; `head` is small
        lo = h * d_k
        qh = qp[:, lo:lo + d_k]        # (S, d_k)
        kh = kp[:, lo:lo + d_k]
        vh = vp[:, lo:lo + d_k]

        # scores = qh @ kh^T / sqrt(d_k)  (contract over d_k, no explicit transpose)
        s = lax.dot_general(qh, kh, (((1,), (1,)), ((), ())),
                            preferred_element_type=f32) * scale
        if has_mask:
            # Matches torch masked_fill(mask == 0, -1e-09) from the reference module.
            s = jnp.where(m0, -1e-9, s)

        # Numerically-stable softmax (mathematically identical to F.softmax).
        s = s - jnp.max(s, axis=-1, keepdims=True)
        e = jnp.exp(s)
        p = e / jnp.sum(e, axis=-1, keepdims=True)
        # TODO(synk): training-mode nn.Dropout(p) on the attention probabilities is
        # omitted; this implements the eval-mode forward (dropout == identity).

        ctx_h = jnp.dot(p, vh, preferred_element_type=f32)             # (S, d_k)
        acc = acc + jnp.dot(ctx_h, wo[lo:lo + d_k, :],
                            preferred_element_type=f32)                # (S, E)

    o_ref[0] = (acc + b_ref[3]).astype(o_ref.dtype)


def multi_headed_attention_forward(query, key, value, w_packed, b_packed, *,
                                   head, mask=None):
    """query/key/value: (B, S, E). w_packed: (4, E, E) in (in, out) layout
    (== PyTorch weight.T), order [Wq, Wk, Wv, Wo]. b_packed: (4, 1, E).
    mask: optional (B, S, S), nonzero = keep. Returns (B, S, E)."""
    B, S, E = query.shape
    assert E % head == 0, "embedding_dim must be divisible by head"
    d_k = E // head
    scale = 1.0 / math.sqrt(d_k)

    kernel = functools.partial(_mha_kernel, head=head, d_k=d_k, scale=scale,
                               has_mask=mask is not None)

    in_specs = [
        pl.BlockSpec((1, S, E), lambda b: (b, 0, 0)),     # query  (one batch row / step)
        pl.BlockSpec((1, S, E), lambda b: (b, 0, 0)),     # key
        pl.BlockSpec((1, S, E), lambda b: (b, 0, 0)),     # value
        pl.BlockSpec((4, E, E), lambda b: (0, 0, 0)),     # packed weights: VMEM-resident
        pl.BlockSpec((4, 1, E), lambda b: (0, 0, 0)),     # packed biases:  VMEM-resident
    ]
    args = [query, key, value, w_packed, b_packed]
    if mask is not None:
        in_specs.append(pl.BlockSpec((1, S, S), lambda b: (b, 0, 0)))
        args.append(mask)

    itemsize = jnp.dtype(query.dtype).itemsize
    flops = B * (8 * S * E * E + 4 * S * S * E)           # 4 projections + QK^T + PV
    bytes_accessed = (4 * B * S * E + 4 * E * E + 4 * E) * itemsize
    if mask is not None:
        bytes_accessed += B * S * S * jnp.dtype(mask.dtype).itemsize

    return pl.pallas_call(
        kernel,
        out_shape=jax.ShapeDtypeStruct((B, S, E), query.dtype),
        grid=(B,),
        in_specs=in_specs,
        out_specs=pl.BlockSpec((1, S, E), lambda b: (b, 0, 0)),
        compiler_params=pltpu.CompilerParams(
            # No cross-step carry on the batch axis -> shard across TensorCores (v7x).
            dimension_semantics=("parallel",),
            # Allow big per-batch slabs everywhere while staying under v7x's
            # 64 MiB physical VMEM.
            vmem_limit_bytes=48 * 1024 * 1024,
        ),
        cost_estimate=pl.CostEstimate(
            flops=flops,
            transcendentals=B * head * S * S,
            bytes_accessed=bytes_accessed,
        ),
    )(*args)


def init_mha_params(rng, head, embedding_dim, dtype=jnp.float32):
    """Four Linear(E, E) layers (Wq, Wk, Wv, Wo). Weights stored as (in, out) so the
    kernel computes x @ W + b, equivalent to PyTorch's x @ weight.T + bias."""
    del head
    E = embedding_dim
    ks = jax.random.split(rng, 8)
    bound = 1.0 / math.sqrt(E)
    ws = [jax.random.uniform(ks[i], (E, E), dtype, -bound, bound) for i in range(4)]
    bs = [jax.random.uniform(ks[4 + i], (E,), dtype, -bound, bound) for i in range(4)]
    return jnp.stack(ws), jnp.stack(bs)[:, None, :]        # (4,E,E), (4,1,E)


def mha_reference(query, key, value, w_packed, b_packed, *, head, mask=None):
    """Pure-JAX reference mirroring the PyTorch module (eval mode)."""
    B, S, E = query.shape
    d_k = E // head

    def proj(x, i):
        return x @ w_packed[i] + b_packed[i, 0]

    q = proj(query, 0).reshape(B, S, head, d_k).transpose(0, 2, 1, 3)
    k = proj(key, 1).reshape(B, S, head, d_k).transpose(0, 2, 1, 3)
    v = proj(value, 2).reshape(B, S, head, d_k).transpose(0, 2, 1, 3)
    scores = jnp.einsum("bhqd,bhkd->bhqk", q, k) / math.sqrt(d_k)
    if mask is not None:
        scores = jnp.where(mask[:, None, :, :] == 0, -1e-9, scores)
    p = jax.nn.softmax(scores, axis=-1)
    ctx = jnp.einsum("bhqk,bhkd->bhqd", p, v)
    ctx = ctx.transpose(0, 2, 1, 3).reshape(B, S, E)
    return ctx @ w_packed[3] + b_packed[3, 0]


if __name__ == "__main__":
    head = 4
    embedding_dim = 32
    B, S = 2, 8

    root = jax.random.PRNGKey(0)
    kq, kk, kv, kparams, kmask = jax.random.split(root, 5)
    query = jax.random.normal(kq, (B, S, embedding_dim), dtype=jnp.float32)
    key = jax.random.normal(kk, (B, S, embedding_dim), dtype=jnp.float32)
    value = jax.random.normal(kv, (B, S, embedding_dim), dtype=jnp.float32)
    w_packed, b_packed = init_mha_params(kparams, head, embedding_dim)

    # No-mask path.
    out = multi_headed_attention_forward(query, key, value, w_packed, b_packed, head=head)
    out = jax.block_until_ready(out)
    ref = mha_reference(query, key, value, w_packed, b_packed, head=head)
    assert out.shape == (B, S, embedding_dim)
    assert jnp.allclose(out, ref, atol=2e-3, rtol=2e-3), "no-mask MHA mismatch vs reference"

    # Masked path (same masked_fill(mask==0, -1e-09) semantics as the module).
    mask = (jax.random.uniform(kmask, (B, S, S)) > 0.3).astype(jnp.int32)
    out_m = multi_headed_attention_forward(query, key, value, w_packed, b_packed,
                                           head=head, mask=mask)
    out_m = jax.block_until_ready(out_m)
    ref_m = mha_reference(query, key, value, w_packed, b_packed, head=head, mask=mask)
    assert jnp.allclose(out_m, ref_m, atol=2e-3, rtol=2e-3), "masked MHA mismatch vs reference"

    print("KERNEL_OK")
</pallas_src>

<mosaic_0001>
module attributes {stable_mosaic.version = 11 : i64} {
  func.func @_mha_kernel(%arg0: i32, %arg1: memref<1x8x32xf32, #tpu.memory_space<vmem>>, %arg2: memref<1x8x32xf32, #tpu.memory_space<vmem>>, %arg3: memref<1x8x32xf32, #tpu.memory_space<vmem>>, %arg4: memref<4x32x32xf32, #tpu.memory_space<vmem>>, %arg5: memref<4x1x32xf32, #tpu.memory_space<vmem>>, %arg6: memref<1x8x32xf32, #tpu.memory_space<vmem>>) attributes {dimension_semantics = [#tpu.dimension_semantics<parallel>], iteration_bounds = array<i64: 2>, scalar_prefetch = 0 : i64, scratch_operands = 0 : i64, tpu.core_type = #tpu.core_type<tc>, window_params = [{transform_indices = @transform_0, window_bounds = array<i64: 1, 8, 32>}, {transform_indices = @transform_1, window_bounds = array<i64: 1, 8, 32>}, {transform_indices = @transform_2, window_bounds = array<i64: 1, 8, 32>}, {pipeline_mode = #tpu.pipeline_mode<synchronous>, transform_indices = @transform_3, window_bounds = array<i64: 4, 32, 32>}, {pipeline_mode = #tpu.pipeline_mode<synchronous>, transform_indices = @transform_4, window_bounds = array<i64: 4, 1, 32>}, {transform_indices = @transform_5, window_bounds = array<i64: 1, 8, 32>}]} {
    %c0 = arith.constant 0 : index
    %c0_0 = arith.constant 0 : index
    %c0_1 = arith.constant 0 : index
    %0 = vector.load %arg1[%c0, %c0_0, %c0_1] : memref<1x8x32xf32, #tpu.memory_space<vmem>>, vector<1x8x32xf32>
    %1 = vector.shape_cast %0 : vector<1x8x32xf32> to vector<8x32xf32>
    %c0_2 = arith.constant 0 : index
    %c0_3 = arith.constant 0 : index
    %c0_4 = arith.constant 0 : index
    %2 = vector.load %arg2[%c0_2, %c0_3, %c0_4] : memref<1x8x32xf32, #tpu.memory_space<vmem>>, vector<1x8x32xf32>
    %3 = vector.shape_cast %2 : vector<1x8x32xf32> to vector<8x32xf32>
    %c0_5 = arith.constant 0 : index
    %c0_6 = arith.constant 0 : index
    %c0_7 = arith.constant 0 : index
    %4 = vector.load %arg3[%c0_5, %c0_6, %c0_7] : memref<1x8x32xf32, #tpu.memory_space<vmem>>, vector<1x8x32xf32>
    %5 = vector.shape_cast %4 : vector<1x8x32xf32> to vector<8x32xf32>
    %c0_8 = arith.constant 0 : index
    %c0_9 = arith.constant 0 : index
    %c0_10 = arith.constant 0 : index
    %6 = vector.load %arg4[%c0_8, %c0_9, %c0_10] : memref<4x32x32xf32, #tpu.memory_space<vmem>>, vector<1x32x32xf32>
    %7 = vector.shape_cast %6 : vector<1x32x32xf32> to vector<32x32xf32>
    %cst = arith.constant dense<0.000000e+00> : vector<8x32xf32>
    %8 = tpu.matmul %1, %7, %cst {dimension_numbers = #tpu.dot_dimension_numbers<[1], [0], [0], [1], [0, 0, 1, 1], [], []>} : vector<8x32xf32>, vector<32x32xf32>, vector<8x32xf32> -> vector<8x32xf32>
    %c0_11 = arith.constant 0 : index
    %c0_12 = arith.constant 0 : index
    %c0_13 = arith.constant 0 : index
    %9 = vector.load %arg5[%c0_11, %c0_12, %c0_13] : memref<4x1x32xf32, #tpu.memory_space<vmem>>, vector<1x1x32xf32>
    %10 = vector.shape_cast %9 : vector<1x1x32xf32> to vector<1x32xf32>
    %11 = vector.broadcast %10 : vector<1x32xf32> to vector<8x32xf32>
    %12 = arith.addf %8, %11 : vector<8x32xf32>
    %c1 = arith.constant 1 : index
    %c0_14 = arith.constant 0 : index
    %c0_15 = arith.constant 0 : index
    %13 = vector.load %arg4[%c1, %c0_14, %c0_15] : memref<4x32x32xf32, #tpu.memory_space<vmem>>, vector<1x32x32xf32>
    %14 = vector.shape_cast %13 : vector<1x32x32xf32> to vector<32x32xf32>
    %cst_16 = arith.constant dense<0.000000e+00> : vector<8x32xf32>
    %15 = tpu.matmul %3, %14, %cst_16 {dimension_numbers = #tpu.dot_dimension_numbers<[1], [0], [0], [1], [0, 0, 1, 1], [], []>} : vector<8x32xf32>, vector<32x32xf32>, vector<8x32xf32> -> vector<8x32xf32>
    %c1_17 = arith.constant 1 : index
    %c0_18 = arith.constant 0 : index
    %c0_19 = arith.constant 0 : index
    %16 = vector.load %arg5[%c1_17, %c0_18, %c0_19] : memref<4x1x32xf32, #tpu.memory_space<vmem>>, vector<1x1x32xf32>
    %17 = vector.shape_cast %16 : vector<1x1x32xf32> to vector<1x32xf32>
    %18 = vector.broadcast %17 : vector<1x32xf32> to vector<8x32xf32>
    %19 = arith.addf %15, %18 : vector<8x32xf32>
    %c2 = arith.constant 2 : index
    %c0_20 = arith.constant 0 : index
    %c0_21 = arith.constant 0 : index
    %20 = vector.load %arg4[%c2, %c0_20, %c0_21] : memref<4x32x32xf32, #tpu.memory_space<vmem>>, vector<1x32x32xf32>
    %21 = vector.shape_cast %20 : vector<1x32x32xf32> to vector<32x32xf32>
    %cst_22 = arith.constant dense<0.000000e+00> : vector<8x32xf32>
    %22 = tpu.matmul %5, %21, %cst_22 {dimension_numbers = #tpu.dot_dimension_numbers<[1], [0], [0], [1], [0, 0, 1, 1], [], []>} : vector<8x32xf32>, vector<32x32xf32>, vector<8x32xf32> -> vector<8x32xf32>
    %c2_23 = arith.constant 2 : index
    %c0_24 = arith.constant 0 : index
    %c0_25 = arith.constant 0 : index
    %23 = vector.load %arg5[%c2_23, %c0_24, %c0_25] : memref<4x1x32xf32, #tpu.memory_space<vmem>>, vector<1x1x32xf32>
    %24 = vector.shape_cast %23 : vector<1x1x32xf32> to vector<1x32xf32>
    %25 = vector.broadcast %24 : vector<1x32xf32> to vector<8x32xf32>
    %26 = arith.addf %22, %25 : vector<8x32xf32>
    %c3 = arith.constant 3 : index
    %c0_26 = arith.constant 0 : index
    %c0_27 = arith.constant 0 : index
    %27 = vector.load %arg4[%c3, %c0_26, %c0_27] : memref<4x32x32xf32, #tpu.memory_space<vmem>>, vector<1x32x32xf32>
    %28 = vector.shape_cast %27 : vector<1x32x32xf32> to vector<32x32xf32>
    %cst_28 = arith.constant 0.000000e+00 : f32
    %29 = vector.broadcast %cst_28 : f32 to vector<8x32xf32>
    %30 = vector.extract_strided_slice %12 {offsets = [0, 0], sizes = [8, 8], strides = [1, 1]} : vector<8x32xf32> to vector<8x8xf32>
    %31 = vector.extract_strided_slice %19 {offsets = [0, 0], sizes = [8, 8], strides = [1, 1]} : vector<8x32xf32> to vector<8x8xf32>
    %32 = vector.extract_strided_slice %26 {offsets = [0, 0], sizes = [8, 8], strides = [1, 1]} : vector<8x32xf32> to vector<8x8xf32>
    %cst_29 = arith.constant dense<0.000000e+00> : vector<8x8xf32>
    %33 = tpu.matmul %30, %31, %cst_29 {dimension_numbers = #tpu.dot_dimension_numbers<[1], [1], [0], [0], [0, 0, 1, 0], [], []>} : vector<8x8xf32>, vector<8x8xf32>, vector<8x8xf32> -> vector<8x8xf32>
    %cst_30 = arith.constant 0.353553385 : f32
    %34 = vector.broadcast %cst_30 : f32 to vector<8x8xf32>
    %35 = arith.mulf %33, %34 : vector<8x8xf32>
    %cst_31 = arith.constant dense<0xFF800000> : vector<8xf32>
    %36 = vector.multi_reduction <maximumf>, %35, %cst_31 [1] : vector<8x8xf32> to vector<8xf32>
    %37 = vector.shape_cast %36 : vector<8xf32> to vector<8x1xf32>
    %38 = vector.broadcast %37 : vector<8x1xf32> to vector<8x8xf32>
    %39 = arith.subf %35, %38 : vector<8x8xf32>
    %40 = math.exp %39 : vector<8x8xf32>
    %cst_32 = arith.constant dense<0.000000e+00> : vector<8xf32>
    %41 = vector.multi_reduction <add>, %40, %cst_32 [1] : vector<8x8xf32> to vector<8xf32>
    %42 = vector.shape_cast %41 : vector<8xf32> to vector<8x1xf32>
    %43 = vector.broadcast %42 : vector<8x1xf32> to vector<8x8xf32>
    %44 = arith.divf %40, %43 : vector<8x8xf32>
    %cst_33 = arith.constant dense<0.000000e+00> : vector<8x8xf32>
    %45 = tpu.matmul %44, %32, %cst_33 {dimension_numbers = #tpu.dot_dimension_numbers<[1], [0], [0], [1], [0, 0, 1, 1], [], []>} : vector<8x8xf32>, vector<8x8xf32>, vector<8x8xf32> -> vector<8x8xf32>
    %46 = vector.extract_strided_slice %28 {offsets = [0, 0], sizes = [8, 32], strides = [1, 1]} : vector<32x32xf32> to vector<8x32xf32>
    %cst_34 = arith.constant dense<0.000000e+00> : vector<8x32xf32>
    %47 = tpu.matmul %45, %46, %cst_34 {dimension_numbers = #tpu.dot_dimension_numbers<[1], [0], [0], [1], [0, 0, 1, 1], [], []>} : vector<8x8xf32>, vector<8x32xf32>, vector<8x32xf32> -> vector<8x32xf32>
    %48 = arith.addf %29, %47 : vector<8x32xf32>
    %49 = vector.extract_strided_slice %12 {offsets = [0, 8], sizes = [8, 8], strides = [1, 1]} : vector<8x32xf32> to vector<8x8xf32>
    %50 = vector.extract_strided_slice %19 {offsets = [0, 8], sizes = [8, 8], strides = [1, 1]} : vector<8x32xf32> to vector<8x8xf32>
    %51 = vector.extract_strided_slice %26 {offsets = [0, 8], sizes = [8, 8], strides = [1, 1]} : vector<8x32xf32> to vector<8x8xf32>
    %cst_35 = arith.constant dense<0.000000e+00> : vector<8x8xf32>
    %52 = tpu.matmul %49, %50, %cst_35 {dimension_numbers = #tpu.dot_dimension_numbers<[1], [1], [0], [0], [0, 0, 1, 0], [], []>} : vector<8x8xf32>, vector<8x8xf32>, vector<8x8xf32> -> vector<8x8xf32>
    %cst_36 = arith.constant 0.353553385 : f32
    %53 = vector.broadcast %cst_36 : f32 to vector<8x8xf32>
    %54 = arith.mulf %52, %53 : vector<8x8xf32>
    %cst_37 = arith.constant dense<0xFF800000> : vector<8xf32>
    %55 = vector.multi_reduction <maximumf>, %54, %cst_37 [1] : vector<8x8xf32> to vector<8xf32>
    %56 = vector.shape_cast %55 : vector<8xf32> to vector<8x1xf32>
    %57 = vector.broadcast %56 : vector<8x1xf32> to vector<8x8xf32>
    %58 = arith.subf %54, %57 : vector<8x8xf32>
    %59 = math.exp %58 : vector<8x8xf32>
    %cst_38 = arith.constant dense<0.000000e+00> : vector<8xf32>
    %60 = vector.multi_reduction <add>, %59, %cst_38 [1] : vector<8x8xf32> to vector<8xf32>
    %61 = vector.shape_cast %60 : vector<8xf32> to vector<8x1xf32>
    %62 = vector.broadcast %61 : vector<8x1xf32> to vector<8x8xf32>
    %63 = arith.divf %59, %62 : vector<8x8xf32>
    %cst_39 = arith.constant dense<0.000000e+00> : vector<8x8xf32>
    %64 = tpu.matmul %63, %51, %cst_39 {dimension_numbers = #tpu.dot_dimension_numbers<[1], [0], [0], [1], [0, 0, 1, 1], [], []>} : vector<8x8xf32>, vector<8x8xf32>, vector<8x8xf32> -> vector<8x8xf32>
    %65 = vector.extract_strided_slice %28 {offsets = [8, 0], sizes = [8, 32], strides = [1, 1]} : vector<32x32xf32> to vector<8x32xf32>
    %cst_40 = arith.constant dense<0.000000e+00> : vector<8x32xf32>
    %66 = tpu.matmul %64, %65, %cst_40 {dimension_numbers = #tpu.dot_dimension_numbers<[1], [0], [0], [1], [0, 0, 1, 1], [], []>} : vector<8x8xf32>, vector<8x32xf32>, vector<8x32xf32> -> vector<8x32xf32>
    %67 = arith.addf %48, %66 : vector<8x32xf32>
    %68 = vector.extract_strided_slice %12 {offsets = [0, 16], sizes = [8, 8], strides = [1, 1]} : vector<8x32xf32> to vector<8x8xf32>
    %69 = vector.extract_strided_slice %19 {offsets = [0, 16], sizes = [8, 8], strides = [1, 1]} : vector<8x32xf32> to vector<8x8xf32>
    %70 = vector.extract_strided_slice %26 {offsets = [0, 16], sizes = [8, 8], strides = [1, 1]} : vector<8x32xf32> to vector<8x8xf32>
    %cst_41 = arith.constant dense<0.000000e+00> : vector<8x8xf32>
    %71 = tpu.matmul %68, %69, %cst_41 {dimension_numbers = #tpu.dot_dimension_numbers<[1], [1], [0], [0], [0, 0, 1, 0], [], []>} : vector<8x8xf32>, vector<8x8xf32>, vector<8x8xf32> -> vector<8x8xf32>
    %cst_42 = arith.constant 0.353553385 : f32
    %72 = vector.broadcast %cst_42 : f32 to vector<8x8xf32>
    %73 = arith.mulf %71, %72 : vector<8x8xf32>
    %cst_43 = arith.constant dense<0xFF800000> : vector<8xf32>
    %74 = vector.multi_reduction <maximumf>, %73, %cst_43 [1] : vector<8x8xf32> to vector<8xf32>
    %75 = vector.shape_cast %74 : vector<8xf32> to vector<8x1xf32>
    %76 = vector.broadcast %75 : vector<8x1xf32> to vector<8x8xf32>
    %77 = arith.subf %73, %76 : vector<8x8xf32>
    %78 = math.exp %77 : vector<8x8xf32>
    %cst_44 = arith.constant dense<0.000000e+00> : vector<8xf32>
    %79 = vector.multi_reduction <add>, %78, %cst_44 [1] : vector<8x8xf32> to vector<8xf32>
    %80 = vector.shape_cast %79 : vector<8xf32> to vector<8x1xf32>
    %81 = vector.broadcast %80 : vector<8x1xf32> to vector<8x8xf32>
    %82 = arith.divf %78, %81 : vector<8x8xf32>
    %cst_45 = arith.constant dense<0.000000e+00> : vector<8x8xf32>
    %83 = tpu.matmul %82, %70, %cst_45 {dimension_numbers = #tpu.dot_dimension_numbers<[1], [0], [0], [1], [0, 0, 1, 1], [], []>} : vector<8x8xf32>, vector<8x8xf32>, vector<8x8xf32> -> vector<8x8xf32>
    %84 = vector.extract_strided_slice %28 {offsets = [16, 0], sizes = [8, 32], strides = [1, 1]} : vector<32x32xf32> to vector<8x32xf32>
    %cst_46 = arith.constant dense<0.000000e+00> : vector<8x32xf32>
    %85 = tpu.matmul %83, %84, %cst_46 {dimension_numbers = #tpu.dot_dimension_numbers<[1], [0], [0], [1], [0, 0, 1, 1], [], []>} : vector<8x8xf32>, vector<8x32xf32>, vector<8x32xf32> -> vector<8x32xf32>
    %86 = arith.addf %67, %85 : vector<8x32xf32>
    %87 = vector.extract_strided_slice %12 {offsets = [0, 24], sizes = [8, 8], strides = [1, 1]} : vector<8x32xf32> to vector<8x8xf32>
    %88 = vector.extract_strided_slice %19 {offsets = [0, 24], sizes = [8, 8], strides = [1, 1]} : vector<8x32xf32> to vector<8x8xf32>
    %89 = vector.extract_strided_slice %26 {offsets = [0, 24], sizes = [8, 8], strides = [1, 1]} : vector<8x32xf32> to vector<8x8xf32>
    %cst_47 = arith.constant dense<0.000000e+00> : vector<8x8xf32>
    %90 = tpu.matmul %87, %88, %cst_47 {dimension_numbers = #tpu.dot_dimension_numbers<[1], [1], [0], [0], [0, 0, 1, 0], [], []>} : vector<8x8xf32>, vector<8x8xf32>, vector<8x8xf32> -> vector<8x8xf32>
    %cst_48 = arith.constant 0.353553385 : f32
    %91 = vector.broadcast %cst_48 : f32 to vector<8x8xf32>
    %92 = arith.mulf %90, %91 : vector<8x8xf32>
    %cst_49 = arith.constant dense<0xFF800000> : vector<8xf32>
    %93 = vector.multi_reduction <maximumf>, %92, %cst_49 [1] : vector<8x8xf32> to vector<8xf32>
    %94 = vector.shape_cast %93 : vector<8xf32> to vector<8x1xf32>
    %95 = vector.broadcast %94 : vector<8x1xf32> to vector<8x8xf32>
    %96 = arith.subf %92, %95 : vector<8x8xf32>
    %97 = math.exp %96 : vector<8x8xf32>
    %cst_50 = arith.constant dense<0.000000e+00> : vector<8xf32>
    %98 = vector.multi_reduction <add>, %97, %cst_50 [1] : vector<8x8xf32> to vector<8xf32>
    %99 = vector.shape_cast %98 : vector<8xf32> to vector<8x1xf32>
    %100 = vector.broadcast %99 : vector<8x1xf32> to vector<8x8xf32>
    %101 = arith.divf %97, %100 : vector<8x8xf32>
    %cst_51 = arith.constant dense<0.000000e+00> : vector<8x8xf32>
    %102 = tpu.matmul %101, %89, %cst_51 {dimension_numbers = #tpu.dot_dimension_numbers<[1], [0], [0], [1], [0, 0, 1, 1], [], []>} : vector<8x8xf32>, vector<8x8xf32>, vector<8x8xf32> -> vector<8x8xf32>
    %103 = vector.extract_strided_slice %28 {offsets = [24, 0], sizes = [8, 32], strides = [1, 1]} : vector<32x32xf32> to vector<8x32xf32>
    %cst_52 = arith.constant dense<0.000000e+00> : vector<8x32xf32>
    %104 = tpu.matmul %102, %103, %cst_52 {dimension_numbers = #tpu.dot_dimension_numbers<[1], [0], [0], [1], [0, 0, 1, 1], [], []>} : vector<8x8xf32>, vector<8x32xf32>, vector<8x32xf32> -> vector<8x32xf32>
    %105 = arith.addf %86, %104 : vector<8x32xf32>
    %c3_53 = arith.constant 3 : index
    %c0_54 = arith.constant 0 : index
    %c0_55 = arith.constant 0 : index
    %106 = vector.load %arg5[%c3_53, %c0_54, %c0_55] : memref<4x1x32xf32, #tpu.memory_space<vmem>>, vector<1x1x32xf32>
    %107 = vector.shape_cast %106 : vector<1x1x32xf32> to vector<1x32xf32>
    %108 = vector.broadcast %107 : vector<1x32xf32> to vector<8x32xf32>
    %109 = arith.addf %105, %108 : vector<8x32xf32>
    %c0_56 = arith.constant 0 : index
    %c0_57 = arith.constant 0 : index
    %c0_58 = arith.constant 0 : index
    %110 = vector.load %arg6[%c0_56, %c0_57, %c0_58] : memref<1x8x32xf32, #tpu.memory_space<vmem>>, vector<1x8x32xf32>
    %111 = vector.shape_cast %110 : vector<1x8x32xf32> to vector<8x32xf32>
    %112 = vector.shape_cast %109 : vector<8x32xf32> to vector<1x8x32xf32>
    tpu.vector_store %arg6[%c0_56, %c0_57, %c0_58], %112 {strides = array<i32>} : memref<1x8x32xf32, #tpu.memory_space<vmem>>, vector<1x8x32xf32>,
    return
  }
  func.func @transform_0(%arg0: i32) -> (i32, i32, i32) {
    %c0_i32 = arith.constant 0 : i32
    %c0_i32_0 = arith.constant 0 : i32
    %c0_i32_1 = arith.constant 0 : i32
    return %arg0, %c0_i32, %c0_i32_0 : i32, i32, i32
  }
  func.func @transform_1(%arg0: i32) -> (i32, i32, i32) {
    %c0_i32 = arith.constant 0 : i32
    %c0_i32_0 = arith.constant 0 : i32
    %c0_i32_1 = arith.constant 0 : i32
    return %arg0, %c0_i32, %c0_i32_0 : i32, i32, i32
  }
  func.func @transform_2(%arg0: i32) -> (i32, i32, i32) {
    %c0_i32 = arith.constant 0 : i32
    %c0_i32_0 = arith.constant 0 : i32
    %c0_i32_1 = arith.constant 0 : i32
    return %arg0, %c0_i32, %c0_i32_0 : i32, i32, i32
  }
  func.func @transform_3(%arg0: i32) -> (i32, i32, i32) {
    %c0_i32 = arith.constant 0 : i32
    %c0_i32_0 = arith.constant 0 : i32
    %c0_i32_1 = arith.constant 0 : i32
    %c0_i32_2 = arith.constant 0 : i32
    return %c0_i32, %c0_i32_0, %c0_i32_1 : i32, i32, i32
  }
  func.func @transform_4(%arg0: i32) -> (i32, i32, i32) {
    %c0_i32 = arith.constant 0 : i32
    %c0_i32_0 = arith.constant 0 : i32
    %c0_i32_1 = arith.constant 0 : i32
    %c0_i32_2 = arith.constant 0 : i32
    return %c0_i32, %c0_i32_0, %c0_i32_1 : i32, i32, i32
  }
  func.func @transform_5(%arg0: i32) -> (i32, i32, i32) {
    %c0_i32 = arith.constant 0 : i32
    %c0_i32_0 = arith.constant 0 : i32
    %c0_i32_1 = arith.constant 0 : i32
    return %arg0, %c0_i32, %c0_i32_0 : i32, i32, i32
  }
}

</mosaic_0001>

<llo_original>
// kernel: tpu_custom_call.1
$region0: #{tpu_custom_call.1}
  #allocation0 [shape = 'u32[]', space=smem, size = 0x4, offset = 0x4, fixed_abs, tag = 'smem constant byte address 0x4 - core index']
  #allocation1 [shape = 'u32[144,128]{1,0:T(1,128)}', space=vmem, size = 0x12000, scoped, tag = 'internal scratch']
  %s0 = inlined_call_operand.hbm [shape: f32[2,8,32], index: 0, kind: input, shape index: {}]
  %s1 = inlined_call_operand.hbm [shape: f32[2,8,32], index: 1, kind: input, shape index: {}]
  %s2 = inlined_call_operand.hbm [shape: f32[2,8,32], index: 2, kind: input, shape index: {}]
  %s3 = inlined_call_operand.hbm [shape: f32[4,32,32], index: 3, kind: input, shape index: {}]
  %s4 = inlined_call_operand.vmem [shape: f32[4,1,32], index: 4, kind: input, shape index: {}]
  %s5 = inlined_call_operand.hbm [shape: f32[2,8,32], index: 5, kind: output, shape index: {}]
  %s6 = sld [smem:[#allocation0]]
  $region69: #{tpu_custom_call.1} parent=0
    _
  %s8 = ssub.s32 1, %s6
  %s9 = scalar_select 0, %s8, %s6
  $region1: #{tpu_custom_call.1} parent=0
    #allocation2 [shape = 'u8[8192]{0}', space=vmem, size = 0x2000, scoped, tag = 'input window, operand 0']
    #allocation3 [shape = 's32[2]{0}', space=sflag, size = 0x8, scoped, tag = 'scoped memory for tpu_custom_call.1']
    #allocation4 [shape = 's32[2]{0}', space=sflag, size = 0x8, scoped, tag = 'scoped memory for tpu_custom_call.1']
    #allocation5 [shape = 'u8[8192]{0}', space=vmem, size = 0x2000, scoped, tag = 'input window, operand 1']
    #allocation6 [shape = 's32[2]{0}', space=sflag, size = 0x8, scoped, tag = 'scoped memory for tpu_custom_call.1']
    #allocation7 [shape = 'u8[8192]{0}', space=vmem, size = 0x2000, scoped, tag = 'input window, operand 2']
    #allocation8 [shape = 'u8[65536]{0}', space=vmem, size = 0x10000, scoped, tag = 'input window, operand 3, single buffered']
    #allocation9 [shape = 's32[1]{0}', space=sflag, size = 0x4, scoped, tag = 'scoped memory for tpu_custom_call.1']
    #allocation10 [shape = 'u8[8192]{0}', space=vmem, size = 0x2000, scoped, tag = 'output window, operand 0']
    %10 = vsyncpa [#allocation3], 0
    %s11 = scalar_lea.sflag [#allocation3], 1
    %12 = vsyncpa %s11, 0
    %13 = vsyncpa [#allocation6], 0
    %s14 = scalar_lea.sflag [#allocation6], 1
    %15 = vsyncpa %s14, 0
    %16 = vsyncpa [#allocation9], 0
    %17 = vsyncpa [#allocation4], 0
    %s18 = scalar_lea.sflag [#allocation4], 1
    %19 = vsyncpa %s18, 0
    loop: start=0, step=1, limit=4
    $region2: #{tpu_custom_call.1} parent=1 // loop_pre_header
      _
    $region3: #{tpu_custom_call.1} parent=1 // loop_header
      %s21 = sphi 0, %s25
      %p22 = scmp.ge.s32.totalorder %s21, 4
      %s31 = sphi 0, %s33
      %s34 = sphi 0, %s31
      %s35 = sphi 0, %s34
      %s51 = sphi 0, %s35
      %s57 = sphi 0, %s59
      %s60 = sphi 0, %s57
      %s61 = sphi 0, %s60
      %s77 = sphi 0, %s61
      %s83 = sphi 0, %s85
      %s86 = sphi 0, %s83
      %s87 = sphi 0, %s86
      %s103 = sphi 0, %s87
      %s107 = sphi 0, %s107
      %s109 = sphi 0, %s107
      %s110 = sphi 0, %s109
      %s124 = sphi 0, %s110
      %s128 = sphi 0, %s128
      %s130 = sphi 0, %s128
      %s131 = sphi 0, %s130
      %s145 = sphi 0, %s131
      %s151 = sphi 0, %s153
      %s154 = sphi 0, %s151
      %s155 = sphi 0, %s154
      %s171 = sphi 0, %s155
    $region4: #{tpu_custom_call.1} parent=1 // loop_header_branch
      %24 = sbr.rel (%p22) target = $region8
    $region5: #{tpu_custom_call.1} parent=1 // loop_body
      %s26 = ssub.s32 %s21, 1
      %s27 = ssub.s32 %s21, 2
      %s28 = sadd.s32 %s21, 1
      %s29 = ssub.s32 %s21, %s28
      %p30 = scmp.eq.s32.totalorder %s29, 0
      %s32 = sadd.s32 %s31, 1
      %s33 = scalar_select %p30, %s31, %s32
      %p36 = pneg %p30
      %p37 = scmp.eq.s32.totalorder %s21, 1
      %p38 = por %p36, %p37
      %p39 = scmp.ne.s32.totalorder %s31, %s34
      %p40 = scmp.eq.s32.totalorder %s21, 0
      %p41 = por %p39, %p40
      %p42 = scmp.ne.s32.totalorder %s31, %s34
      %p43 = scmp.eq.s32.totalorder %s26, 1
      %p44 = por %p42, %p43
      %p45 = scmp.ne.s32.totalorder %s34, %s35
      %p46 = scmp.eq.s32.totalorder %s26, 0
      %p47 = por %p45, %p46
      %p48 = scmp.ne.s32.totalorder %s34, %s35
      %p49 = scmp.eq.s32.totalorder %s27, 1
      %p50 = por %p48, %p49
      %p52 = scmp.ne.s32.totalorder %s35, %s51
      %p53 = scmp.eq.s32.totalorder %s27, 0
      %p54 = por %p52, %p53
      %s55 = ssub.s32 %s21, %s28
      %p56 = scmp.eq.s32.totalorder %s55, 0
      %s58 = sadd.s32 %s57, 1
      %s59 = scalar_select %p56, %s57, %s58
      %p62 = pneg %p56
      %p63 = scmp.eq.s32.totalorder %s21, 1
      %p64 = por %p62, %p63
      %p65 = scmp.ne.s32.totalorder %s57, %s60
      %p66 = scmp.eq.s32.totalorder %s21, 0
      %p67 = por %p65, %p66
      %p68 = scmp.ne.s32.totalorder %s57, %s60
      %p69 = scmp.eq.s32.totalorder %s26, 1
      %p70 = por %p68, %p69
      %p71 = scmp.ne.s32.totalorder %s60, %s61
      %p72 = scmp.eq.s32.totalorder %s26, 0
      %p73 = por %p71, %p72
      %p74 = scmp.ne.s32.totalorder %s60, %s61
      %p75 = scmp.eq.s32.totalorder %s27, 1
      %p76 = por %p74, %p75
      %p78 = scmp.ne.s32.totalorder %s61, %s77
      %p79 = scmp.eq.s32.totalorder %s27, 0
      %p80 = por %p78, %p79
      %s81 = ssub.s32 %s21, %s28
      %p82 = scmp.eq.s32.totalorder %s81, 0
      %s84 = sadd.s32 %s83, 1
      %s85 = scalar_select %p82, %s83, %s84
      %p88 = pneg %p82
      %p89 = scmp.eq.s32.totalorder %s21, 1
      %p90 = por %p88, %p89
      %p91 = scmp.ne.s32.totalorder %s83, %s86
      %p92 = scmp.eq.s32.totalorder %s21, 0
      %p93 = por %p91, %p92
      %p94 = scmp.ne.s32.totalorder %s83, %s86
      %p95 = scmp.eq.s32.totalorder %s26, 1
      %p96 = por %p94, %p95
      %p97 = scmp.ne.s32.totalorder %s86, %s87
      %p98 = scmp.eq.s32.totalorder %s26, 0
      %p99 = por %p97, %p98
      %p100 = scmp.ne.s32.totalorder %s86, %s87
      %p101 = scmp.eq.s32.totalorder %s27, 1
      %p102 = por %p100, %p101
      %p104 = scmp.ne.s32.totalorder %s87, %s103
      %p105 = scmp.eq.s32.totalorder %s27, 0
      %p106 = por %p104, %p105
      %s108 = sadd.s32 %s107, 1
      %p111 = scmp.eq.s32.totalorder %s21, 1
      %p112 = scmp.ne.s32.totalorder %s107, %s109
      %p113 = scmp.eq.s32.totalorder %s21, 0
      %p114 = por %p112, %p113
      %p115 = scmp.ne.s32.totalorder %s107, %s109
      %p116 = scmp.eq.s32.totalorder %s26, 1
      %p117 = por %p115, %p116
      %p118 = scmp.ne.s32.totalorder %s109, %s110
      %p119 = scmp.eq.s32.totalorder %s26, 0
      %p120 = por %p118, %p119
      %p121 = scmp.ne.s32.totalorder %s109, %s110
      %p122 = scmp.eq.s32.totalorder %s27, 1
      %p123 = por %p121, %p122
      %p125 = scmp.ne.s32.totalorder %s110, %s124
      %p126 = scmp.eq.s32.totalorder %s27, 0
      %p127 = por %p125, %p126
      %s129 = sadd.s32 %s128, 1
      %p132 = scmp.eq.s32.totalorder %s21, 1
      %p133 = scmp.ne.s32.totalorder %s128, %s130
      %p134 = scmp.eq.s32.totalorder %s21, 0
      %p135 = por %p133, %p134
      %p136 = scmp.ne.s32.totalorder %s128, %s130
      %p137 = scmp.eq.s32.totalorder %s26, 1
      %p138 = por %p136, %p137
      %p139 = scmp.ne.s32.totalorder %s130, %s131
      %p140 = scmp.eq.s32.totalorder %s26, 0
      %p141 = por %p139, %p140
      %p142 = scmp.ne.s32.totalorder %s130, %s131
      %p143 = scmp.eq.s32.totalorder %s27, 1
      %p144 = por %p142, %p143
      %p146 = scmp.ne.s32.totalorder %s131, %s145
      %p147 = scmp.eq.s32.totalorder %s27, 0
      %p148 = por %p146, %p147
      %s149 = ssub.s32 %s21, %s28
      %p150 = scmp.eq.s32.totalorder %s149, 0
      %s152 = sadd.s32 %s151, 1
      %s153 = scalar_select %p150, %s151, %s152
      %p156 = pneg %p150
      %p157 = scmp.eq.s32.totalorder %s21, 1
      %p158 = por %p156, %p157
      %p159 = scmp.ne.s32.totalorder %s151, %s154
      %p160 = scmp.eq.s32.totalorder %s21, 0
      %p161 = por %p159, %p160
      %p162 = scmp.ne.s32.totalorder %s151, %s154
      %p163 = scmp.eq.s32.totalorder %s26, 1
      %p164 = por %p162, %p163
      %p165 = scmp.ne.s32.totalorder %s154, %s155
      %p166 = scmp.eq.s32.totalorder %s26, 0
      %p167 = por %p165, %p166
      %p168 = scmp.ne.s32.totalorder %s154, %s155
      %p169 = scmp.eq.s32.totalorder %s27, 1
      %p170 = por %p168, %p169
      %p172 = scmp.ne.s32.totalorder %s155, %s171
      %p173 = scmp.eq.s32.totalorder %s27, 0
      %p174 = por %p172, %p173
      %p175 = scmp.le.s32.totalorder 1, %s21
      %p176 = scmp.lt.s32.totalorder %s21, 3
      %p177 = pnand %p175, %p176
      %p178 = pneg %p177
      // Predicated region
      $region9: #{tpu_custom_call.1} parent=5 // pred_check
        _
      $region10: #{tpu_custom_call.1} parent=5 // pred_check_branch
        %180 = sbr.rel (%p177) target = $region12
      $region11: #{tpu_custom_call.1} parent=5 // pred_region
        %s181 = ssub.s32 %s21, 1
        // Predicated region
        $region13: #{tpu_custom_call.1} parent=11 // pred_check
          %p182 = pneg %p120
        $region14: #{tpu_custom_call.1} parent=11 // pred_check_branch
          %184 = sbr.rel (%p182) target = $region16
        $region15: #{tpu_custom_call.1} parent=11 // pred_region
          %s186 = ssub.s32 2048, 2048
          %187 = vsyncadd [#allocation9], %s186
          %s188 = sshll.u32 [#allocation8], 4
          %s189 = int_to_ptr.vmem [resolvable:$true] %s188
          %194 = dma.hbm_to_vmem [thread:$0]  %s3, 2048, %s189, [#allocation9], 128, 128, 8
        $region16: #{tpu_custom_call.1} parent=11 // pred_fallthru
          _
        // Predicated region
        $region17: #{tpu_custom_call.1} parent=11 // pred_check
          %p195 = pneg %p141
        $region18: #{tpu_custom_call.1} parent=11 // pred_check_branch
          %197 = sbr.rel (%p195) target = $region20
        $region19: #{tpu_custom_call.1} parent=11 // pred_region
          _
        $region20: #{tpu_custom_call.1} parent=11 // pred_fallthru
          _
      $region12: #{tpu_custom_call.1} parent=5 // pred_fallthru
        _
      %p198 = scmp.lt.s32.totalorder %s21, 2
      // Predicated region
      $region21: #{tpu_custom_call.1} parent=5 // pred_check
        %p199 = pneg %p198
      $region22: #{tpu_custom_call.1} parent=5 // pred_check_branch
        %201 = sbr.rel (%p199) target = $region24
      $region23: #{tpu_custom_call.1} parent=5 // pred_region
        // Predicated region
        $region25: #{tpu_custom_call.1} parent=23 // pred_check
          %p202 = pneg %p41
        $region26: #{tpu_custom_call.1} parent=23 // pred_check_branch
          %204 = sbr.rel (%p202) target = $region28
        $region27: #{tpu_custom_call.1} parent=23 // pred_region
          %s205 = sand.u32 %s31, 1
          %s206 = scalar_lea.sflag [#allocation3], %s205
          %s207 = sand.u32 %s31, 1
          %s208 = smul.addr %s207, 8
          %s209 = scalar_lea.vmem [#allocation2], %s208
          %s211 = ssub.s32 128, 128
          %212 = vsyncadd %s206, %s211
          %s213 = smul.addr %s21, 128
          %s214 = scalar_lea.hbm %s0, %s213
          %s216 = sshll.u32 %s209, 4
          %s217 = int_to_ptr.vmem [resolvable:$true] %s216
          %219 = dma.hbm_to_vmem [thread:$0]  %s214, 128, %s217, %s206
        $region28: #{tpu_custom_call.1} parent=23 // pred_fallthru
          _
        // Predicated region
        $region29: #{tpu_custom_call.1} parent=23 // pred_check
          %p220 = pneg %p67
        $region30: #{tpu_custom_call.1} parent=23 // pred_check_branch
          %222 = sbr.rel (%p220) target = $region32
        $region31: #{tpu_custom_call.1} parent=23 // pred_region
          %s223 = sand.u32 %s21, 1
          %s224 = scalar_lea.sflag [#allocation6], %s223
          %s225 = sand.u32 %s57, 1
          %s226 = smul.addr %s225, 8
          %s227 = scalar_lea.vmem [#allocation5], %s226
          %s229 = ssub.s32 128, 128
          %230 = vsyncadd %s224, %s229
          %s231 = smul.addr %s21, 128
          %s232 = scalar_lea.hbm %s1, %s231
          %s234 = sshll.u32 %s227, 4
          %s235 = int_to_ptr.vmem [resolvable:$true] %s234
          %237 = dma.hbm_to_vmem [thread:$0]  %s232, 128, %s235, %s224
        $region32: #{tpu_custom_call.1} parent=23 // pred_fallthru
          _
        // Predicated region
        $region33: #{tpu_custom_call.1} parent=23 // pred_check
          %p238 = pneg %p93
        $region34: #{tpu_custom_call.1} parent=23 // pred_check_branch
          %240 = sbr.rel (%p238) target = $region36
        $region35: #{tpu_custom_call.1} parent=23 // pred_region
          %s241 = sand.u32 %s21, 1
          %s242 = scalar_lea.sflag [#allocation6], %s241
          %s243 = sand.u32 %s83, 1
          %s244 = smul.addr %s243, 8
          %s245 = scalar_lea.vmem [#allocation7], %s244
          %s247 = ssub.s32 128, 128
          %248 = vsyncadd %s242, %s247
          %s249 = smul.addr %s21, 128
          %s250 = scalar_lea.hbm %s2, %s249
          %s252 = sshll.u32 %s245, 4
          %s253 = int_to_ptr.vmem [resolvable:$true] %s252
          %255 = dma.hbm_to_vmem [thread:$0]  %s250, 128, %s253, %s242
        $region36: #{tpu_custom_call.1} parent=23 // pred_fallthru
          _
      $region24: #{tpu_custom_call.1} parent=5 // pred_fallthru
        _
      %p256 = scmp.le.s32.totalorder 1, %s21
      %p257 = scmp.lt.s32.totalorder %s21, 3
      %p258 = pnand %p256, %p257
      %p259 = pneg %p258
      // Predicated region
      $region37: #{tpu_custom_call.1} parent=5 // pred_check
        _
      $region38: #{tpu_custom_call.1} parent=5 // pred_check_branch
        %261 = sbr.rel (%p258) target = $region40
      $region39: #{tpu_custom_call.1} parent=5 // pred_region
        %s262 = ssub.s32 %s21, 1
        %s263 = sand.u32 %s34, 1
        %s264 = scalar_lea.sflag [#allocation3], %s263
        %s265 = sand.u32 %s34, 1
        %s266 = smul.addr %s265, 8
        %s267 = scalar_lea.vmem [#allocation2], %s266
        // Predicated region
        $region41: #{tpu_custom_call.1} parent=39 // pred_check
          %p268 = pneg %p47
        $region42: #{tpu_custom_call.1} parent=39 // pred_check_branch
          %270 = sbr.rel (%p268) target = $region44
        $region43: #{tpu_custom_call.1} parent=39 // pred_region
          %271 = dma.done %s264, 128
        $region44: #{tpu_custom_call.1} parent=39 // pred_fallthru
          _
        %s272 = sand.u32 %s26, 1
        %s273 = scalar_lea.sflag [#allocation6], %s272
        %s274 = sand.u32 %s60, 1
        %s275 = smul.addr %s274, 8
        %s276 = scalar_lea.vmem [#allocation5], %s275
        // Predicated region
        $region45: #{tpu_custom_call.1} parent=39 // pred_check
          %p277 = pneg %p73
        $region46: #{tpu_custom_call.1} parent=39 // pred_check_branch
          %279 = sbr.rel (%p277) target = $region48
        $region47: #{tpu_custom_call.1} parent=39 // pred_region
          %280 = dma.done %s273, 128
        $region48: #{tpu_custom_call.1} parent=39 // pred_fallthru
          _
        %s281 = sand.u32 %s26, 1
        %s282 = scalar_lea.sflag [#allocation6], %s281
        %s283 = sand.u32 %s86, 1
        %s284 = smul.addr %s283, 8
        %s285 = scalar_lea.vmem [#allocation7], %s284
        // Predicated region
        $region49: #{tpu_custom_call.1} parent=39 // pred_check
          %p286 = pneg %p99
        $region50: #{tpu_custom_call.1} parent=39 // pred_check_branch
          %288 = sbr.rel (%p286) target = $region52
        $region51: #{tpu_custom_call.1} parent=39 // pred_region
          %289 = dma.done %s282, 128
        $region52: #{tpu_custom_call.1} parent=39 // pred_fallthru
          _
        // Predicated region
        $region53: #{tpu_custom_call.1} parent=39 // pred_check
          %p290 = pneg %p120
        $region54: #{tpu_custom_call.1} parent=39 // pred_check_branch
          %292 = sbr.rel (%p290) target = $region56
        $region55: #{tpu_custom_call.1} parent=39 // pred_region
          %293 = dma.done [#allocation9], 2048
        $region56: #{tpu_custom_call.1} parent=39 // pred_fallthru
          _
        %s294 = sand.u32 %s34, 1
        %s295 = scalar_lea.sflag [#allocation3], %s294
        %s296 = sand.u32 %s34, 1
        %s297 = smul.addr %s296, 8
        %s298 = scalar_lea.vmem [#allocation2], %s297
        %p299 = pneg %p47
        %p300 = pneg %p44
        %s301 = sand.u32 %s26, 1
        %s302 = scalar_lea.sflag [#allocation6], %s301
        %s303 = sand.u32 %s60, 1
        %s304 = smul.addr %s303, 8
        %s305 = scalar_lea.vmem [#allocation5], %s304
        %p306 = pneg %p73
        %p307 = pneg %p70
        %s308 = sand.u32 %s26, 1
        %s309 = scalar_lea.sflag [#allocation6], %s308
        %s310 = sand.u32 %s86, 1
        %s311 = smul.addr %s310, 8
        %s312 = scalar_lea.vmem [#allocation7], %s311
        %p313 = pneg %p99
        %p314 = pneg %p96
        %p315 = pneg %p120
        %p316 = pneg %p117
        %p317 = pneg %p141
        %p318 = pneg %p138
        %p319 = pneg %p167
        %p320 = pneg %p164
        %s321 = sand.u32 %s154, 1
        %s322 = scalar_lea.sflag [#allocation4], %s321
        %s323 = sand.u32 %s154, 1
        %s324 = smul.addr %s323, 8
        %s325 = scalar_lea.vmem [#allocation10], %s324
        %v326 = vld [vmem:[%s267] sm:$0xff]
        %v327 = vld [vmem:[%s276] sm:$0xff]
        %v328 = vld [vmem:[%s285] sm:$0xff]
        %v329 = vld [vmem:[#allocation8] sm:$0xff]
        %v330 = vld [vmem:[#allocation8 + $0x8] sm:$0xff]
        %v331 = vld [vmem:[#allocation8 + $0x10] sm:$0xff]
        %v332 = vld [vmem:[#allocation8 + $0x18] sm:$0xff]
        %v333 = vld [vmem:[%s4] sm:$0x1]
        %v335 = vlaneseq
        %v336 = vshrl.u32 %v335, 7
        %v337 = vsub.s32 0, %v336
        %v338 = vrot.slane %v333, %v337
        %vm340 = vcmask 261120
        %v342 = vsel %vm340, %v326, 0
        %344 = vmatprep.subr.mxu0 0.0
        %345 = vmatpush1.msra.mxu0 %v329
        %346 = vmatprep.subr.mxu0 0.0
        %347 = vmatpush1.msra.mxu0 %v330
        %348 = vmatprep.subr.mxu0 0.0
        %349 = vmatpush1.msra.mxu0 %v331
        %350 = vmatprep.subr.mxu0 0.0
        %351 = vmatpush1.msra.mxu0 %v332
        %352 = vmatprep.subr.mxu0 0.0
        %353 = vmatpush1.msra.mxu0 0.0
        %354 = vmatprep.subr.mxu0 0.0
        %355 = vmatpush1.msra.mxu0 0.0
        %356 = vmatprep.subr.mxu0 0.0
        %357 = vmatpush1.msra.mxu0 0.0
        %358 = vmatprep.subr.mxu0 0.0
        %359 = vmatpush1.msra.mxu0 0.0
        %360 = vmatprep.subr.mxu0 0.0
        %361 = vmatpush1.msra.mxu0 0.0
        %362 = vmatprep.subr.mxu0 0.0
        %363 = vmatpush1.msra.mxu0 0.0
        %364 = vmatprep.subr.mxu0 0.0
        %365 = vmatpush1.msra.mxu0 0.0
        %366 = vmatprep.subr.mxu0 0.0
        %367 = vmatpush1.msra.mxu0 0.0
        %368 = vmatprep.subr.mxu0 0.0
        %369 = vmatpush1.msra.mxu0 0.0
        %370 = vmatprep.subr.mxu0 0.0
        %371 = vmatpush1.msra.mxu0 0.0
        %372 = vmatprep.subr.mxu0 0.0
        %373 = vmatpush1.msra.mxu0 0.0
        %374 = vmatprep.subr.mxu0 0.0
        %375 = vmatpush1.msra.mxu0 0.0
        %376 = vmatprep.subr.mxu0 0.0
        %377 = vmatpush1.msra.mxu0 0.0
        %378 = vmatprep.subr.mxu0 0.0
        %379 = vmatpush1.msra.mxu0 0.0
        %380 = vmatprep.subr.mxu0 0.0
        %381 = vmatpush1.msra.mxu0 0.0
        %382 = vmatprep.subr.mxu0 0.0
        %383 = vmatpush1.msra.mxu0 0.0
        %384 = vmatprep.subr.mxu0 0.0
        %385 = vmatpush1.msra.mxu0 0.0
        %386 = vmatprep.subr.mxu0 0.0
        %387 = vmatpush1.msra.mxu0 0.0
        %388 = vmatprep.subr.mxu0 0.0
        %389 = vmatpush1.msra.mxu0 0.0
        %390 = vmatprep.subr.mxu0 0.0
        %391 = vmatpush1.msra.mxu0 0.0
        %392 = vmatprep.subr.mxu0 0.0
        %393 = vmatpush1.msra.mxu0 0.0
        %394 = vmatprep.subr.mxu0 0.0
        %395 = vmatpush1.msra.mxu0 0.0
        %396 = vmatprep.subr.mxu0 0.0
        %397 = vmatpush1.msra.mxu0 0.0
        %398 = vmatprep.subr.mxu0 0.0
        %399 = vmatpush1.msra.mxu0 0.0
        %400 = vmatprep.subr.mxu0 0.0
        %401 = vmatpush1.msra.mxu0 0.0
        %402 = vmatprep.subr.mxu0 0.0
        %403 = vmatpush1.msra.mxu0 0.0
        %404 = vmatprep.subr.mxu0 0.0
        %405 = vmatpush1.msra.mxu0 0.0
        %406 = vmatprep.subr.mxu0 0.0
        %407 = vmatpush1.msra.mxu0 0.0
        %408 = vmatprep.mubr.f32.mxu0 0.0
        %409 = vmatmul.mubr.f32.gmra.mrb[0].mxu0 %v342
        %v410 = vpop.f32.mrb[0].mxu0
        %v411 = vadd.f32 %v338, %v410
        %v412 = vpop.f32.mrb[0].mxu0
        %413 = vdwg.mxu0
        %s414 = scalar_lea.vmem [#allocation8], 32
        %v415 = vld [vmem:[%s414] sm:$0xff]
        %v416 = vld [vmem:[%s414 + $0x8] sm:$0xff]
        %v417 = vld [vmem:[%s414 + $0x10] sm:$0xff]
        %v418 = vld [vmem:[%s414 + $0x18] sm:$0xff]
        %s419 = scalar_lea.vmem %s4, 1
        %v420 = vld [vmem:[%s419] sm:$0x1]
        %v422 = vlaneseq
        %v423 = vshrl.u32 %v422, 7
        %v424 = vsub.s32 0, %v423
        %v425 = vrot.slane %v420, %v424
        %v428 = vsel %vm340, %v327, 0
        %430 = vmatprep.subr.mxu0 0.0
        %431 = vmatpush1.msra.mxu0 %v415
        %432 = vmatprep.subr.mxu0 0.0
        %433 = vmatpush1.msra.mxu0 %v416
        %434 = vmatprep.subr.mxu0 0.0
        %435 = vmatpush1.msra.mxu0 %v417
        %436 = vmatprep.subr.mxu0 0.0
        %437 = vmatpush1.msra.mxu0 %v418
        %438 = vmatprep.subr.mxu0 0.0
        %439 = vmatpush1.msra.mxu0 0.0
        %440 = vmatprep.subr.mxu0 0.0
        %441 = vmatpush1.msra.mxu0 0.0
        %442 = vmatprep.subr.mxu0 0.0
        %443 = vmatpush1.msra.mxu0 0.0
        %444 = vmatprep.subr.mxu0 0.0
        %445 = vmatpush1.msra.mxu0 0.0
        %446 = vmatprep.subr.mxu0 0.0
        %447 = vmatpush1.msra.mxu0 0.0
        %448 = vmatprep.subr.mxu0 0.0
        %449 = vmatpush1.msra.mxu0 0.0
        %450 = vmatprep.subr.mxu0 0.0
        %451 = vmatpush1.msra.mxu0 0.0
        %452 = vmatprep.subr.mxu0 0.0
        %453 = vmatpush1.msra.mxu0 0.0
        %454 = vmatprep.subr.mxu0 0.0
        %455 = vmatpush1.msra.mxu0 0.0
        %456 = vmatprep.subr.mxu0 0.0
        %457 = vmatpush1.msra.mxu0 0.0
        %458 = vmatprep.subr.mxu0 0.0
        %459 = vmatpush1.msra.mxu0 0.0
        %460 = vmatprep.subr.mxu0 0.0
        %461 = vmatpush1.msra.mxu0 0.0
        %462 = vmatprep.subr.mxu0 0.0
        %463 = vmatpush1.msra.mxu0 0.0
        %464 = vmatprep.subr.mxu0 0.0
        %465 = vmatpush1.msra.mxu0 0.0
        %466 = vmatprep.subr.mxu0 0.0
        %467 = vmatpush1.msra.mxu0 0.0
        %468 = vmatprep.subr.mxu0 0.0
        %469 = vmatpush1.msra.mxu0 0.0
        %470 = vmatprep.subr.mxu0 0.0
        %471 = vmatpush1.msra.mxu0 0.0
        %472 = vmatprep.subr.mxu0 0.0
        %473 = vmatpush1.msra.mxu0 0.0
        %474 = vmatprep.subr.mxu0 0.0
        %475 = vmatpush1.msra.mxu0 0.0
        %476 = vmatprep.subr.mxu0 0.0
        %477 = vmatpush1.msra.mxu0 0.0
        %478 = vmatprep.subr.mxu0 0.0
        %479 = vmatpush1.msra.mxu0 0.0
        %480 = vmatprep.subr.mxu0 0.0
        %481 = vmatpush1.msra.mxu0 0.0
        %482 = vmatprep.subr.mxu0 0.0
        %483 = vmatpush1.msra.mxu0 0.0
        %484 = vmatprep.subr.mxu0 0.0
        %485 = vmatpush1.msra.mxu0 0.0
        %486 = vmatprep.subr.mxu0 0.0
        %487 = vmatpush1.msra.mxu0 0.0
        %488 = vmatprep.subr.mxu0 0.0
        %489 = vmatpush1.msra.mxu0 0.0
        %490 = vmatprep.subr.mxu0 0.0
        %491 = vmatpush1.msra.mxu0 0.0
        %492 = vmatprep.subr.mxu0 0.0
        %493 = vmatpush1.msra.mxu0 0.0
        %494 = vmatprep.mubr.f32.mxu0 0.0
        %495 = vmatmul.mubr.f32.gmra.mrb[0].mxu0 %v428
        %v496 = vpop.f32.mrb[0].mxu0
        %v497 = vadd.f32 %v425, %v496
        %v498 = vpop.f32.mrb[0].mxu0
        %499 = vdwg.mxu0
        %s500 = scalar_lea.vmem [#allocation8], 64
        %v501 = vld [vmem:[%s500] sm:$0xff]
        %v502 = vld [vmem:[%s500 + $0x8] sm:$0xff]
        %v503 = vld [vmem:[%s500 + $0x10] sm:$0xff]
        %v504 = vld [vmem:[%s500 + $0x18] sm:$0xff]
        %s505 = scalar_lea.vmem %s4, 2
        %v506 = vld [vmem:[%s505] sm:$0x1]
        %v508 = vlaneseq
        %v509 = vshrl.u32 %v508, 7
        %v510 = vsub.s32 0, %v509
        %v511 = vrot.slane %v506, %v510
        %v514 = vsel %vm340, %v328, 0
        %516 = vmatprep.subr.mxu0 0.0
        %517 = vmatpush1.msra.mxu0 %v501
        %518 = vmatprep.subr.mxu0 0.0
        %519 = vmatpush1.msra.mxu0 %v502
        %520 = vmatprep.subr.mxu0 0.0
        %521 = vmatpush1.msra.mxu0 %v503
        %522 = vmatprep.subr.mxu0 0.0
        %523 = vmatpush1.msra.mxu0 %v504
        %524 = vmatprep.subr.mxu0 0.0
        %525 = vmatpush1.msra.mxu0 0.0
        %526 = vmatprep.subr.mxu0 0.0
        %527 = vmatpush1.msra.mxu0 0.0
        %528 = vmatprep.subr.mxu0 0.0
        %529 = vmatpush1.msra.mxu0 0.0
        %530 = vmatprep.subr.mxu0 0.0
        %531 = vmatpush1.msra.mxu0 0.0
        %532 = vmatprep.subr.mxu0 0.0
        %533 = vmatpush1.msra.mxu0 0.0
        %534 = vmatprep.subr.mxu0 0.0
        %535 = vmatpush1.msra.mxu0 0.0
        %536 = vmatprep.subr.mxu0 0.0
        %537 = vmatpush1.msra.mxu0 0.0
        %538 = vmatprep.subr.mxu0 0.0
        %539 = vmatpush1.msra.mxu0 0.0
        %540 = vmatprep.subr.mxu0 0.0
        %541 = vmatpush1.msra.mxu0 0.0
        %542 = vmatprep.subr.mxu0 0.0
        %543 = vmatpush1.msra.mxu0 0.0
        %544 = vmatprep.subr.mxu0 0.0
        %545 = vmatpush1.msra.mxu0 0.0
        %546 = vmatprep.subr.mxu0 0.0
        %547 = vmatpush1.msra.mxu0 0.0
        %548 = vmatprep.subr.mxu0 0.0
        %549 = vmatpush1.msra.mxu0 0.0
        %550 = vmatprep.subr.mxu0 0.0
        %551 = vmatpush1.msra.mxu0 0.0
        %552 = vmatprep.subr.mxu0 0.0
        %553 = vmatpush1.msra.mxu0 0.0
        %554 = vmatprep.subr.mxu0 0.0
        %555 = vmatpush1.msra.mxu0 0.0
        %556 = vmatprep.subr.mxu0 0.0
        %557 = vmatpush1.msra.mxu0 0.0
        %558 = vmatprep.subr.mxu0 0.0
        %559 = vmatpush1.msra.mxu0 0.0
        %560 = vmatprep.subr.mxu0 0.0
        %561 = vmatpush1.msra.mxu0 0.0
        %562 = vmatprep.subr.mxu0 0.0
        %563 = vmatpush1.msra.mxu0 0.0
        %564 = vmatprep.subr.mxu0 0.0
        %565 = vmatpush1.msra.mxu0 0.0
        %566 = vmatprep.subr.mxu0 0.0
        %567 = vmatpush1.msra.mxu0 0.0
        %568 = vmatprep.subr.mxu0 0.0
        %569 = vmatpush1.msra.mxu0 0.0
        %570 = vmatprep.subr.mxu0 0.0
        %571 = vmatpush1.msra.mxu0 0.0
        %572 = vmatprep.subr.mxu0 0.0
        %573 = vmatpush1.msra.mxu0 0.0
        %574 = vmatprep.subr.mxu0 0.0
        %575 = vmatpush1.msra.mxu0 0.0
        %576 = vmatprep.subr.mxu0 0.0
        %577 = vmatpush1.msra.mxu0 0.0
        %578 = vmatprep.subr.mxu0 0.0
        %579 = vmatpush1.msra.mxu0 0.0
        %580 = vmatprep.mubr.f32.mxu0 0.0
        %581 = vmatmul.mubr.f32.gmra.mrb[0].mxu0 %v514
        %v582 = vpop.f32.mrb[0].mxu0
        %v583 = vadd.f32 %v511, %v582
        %v584 = vpop.f32.mrb[0].mxu0
        %585 = vdwg.mxu0
        %s586 = scalar_lea.vmem [#allocation8], 96
        %v587 = vld [vmem:[%s586] sm:$0xff]
        %v588 = vld [vmem:[%s586 + $0x8] sm:$0xff]
        %v589 = vld [vmem:[%s586 + $0x10] sm:$0xff]
        %v590 = vld [vmem:[%s586 + $0x18] sm:$0xff]
        %vm591 = vcmask 64512
        %v593 = vsel %vm591, %v411, 0
        %v596 = vsel %vm591, %v497, 0
        %598 = vmatprep.subr.mxu0 0.0
        %599 = vmatpush1.xpose.msra.mxu0 %v596
        %600 = vmatprep.subr.mxu0 0.0
        %601 = vmatpush1.xpose.msra.mxu0 0.0
        %602 = vmatprep.subr.mxu0 0.0
        %603 = vmatpush1.xpose.msra.mxu0 0.0
        %604 = vmatprep.subr.mxu0 0.0
        %605 = vmatpush1.xpose.msra.mxu0 0.0
        %606 = vmatprep.subr.mxu0 0.0
        %607 = vmatpush1.xpose.msra.mxu0 0.0
        %608 = vmatprep.subr.mxu0 0.0
        %609 = vmatpush1.xpose.msra.mxu0 0.0
        %610 = vmatprep.subr.mxu0 0.0
        %611 = vmatpush1.xpose.msra.mxu0 0.0
        %612 = vmatprep.subr.mxu0 0.0
        %613 = vmatpush1.xpose.msra.mxu0 0.0
        %614 = vmatprep.subr.mxu0 0.0
        %615 = vmatpush1.xpose.msra.mxu0 0.0
        %616 = vmatprep.subr.mxu0 0.0
        %617 = vmatpush1.xpose.msra.mxu0 0.0
        %618 = vmatprep.subr.mxu0 0.0
        %619 = vmatpush1.xpose.msra.mxu0 0.0
        %620 = vmatprep.subr.mxu0 0.0
        %621 = vmatpush1.xpose.msra.mxu0 0.0
        %622 = vmatprep.subr.mxu0 0.0
        %623 = vmatpush1.xpose.msra.mxu0 0.0
        %624 = vmatprep.subr.mxu0 0.0
        %625 = vmatpush1.xpose.msra.mxu0 0.0
        %626 = vmatprep.subr.mxu0 0.0
        %627 = vmatpush1.xpose.msra.mxu0 0.0
        %628 = vmatprep.subr.mxu0 0.0
        %629 = vmatpush1.xpose.msra.mxu0 0.0
        %630 = vmatprep.subr.mxu0 0.0
        %631 = vmatpush1.xpose.msra.mxu0 0.0
        %632 = vmatprep.subr.mxu0 0.0
        %633 = vmatpush1.xpose.msra.mxu0 0.0
        %634 = vmatprep.subr.mxu0 0.0
        %635 = vmatpush1.xpose.msra.mxu0 0.0
        %636 = vmatprep.subr.mxu0 0.0
        %637 = vmatpush1.xpose.msra.mxu0 0.0
        %638 = vmatprep.subr.mxu0 0.0
        %639 = vmatpush1.xpose.msra.mxu0 0.0
        %640 = vmatprep.subr.mxu0 0.0
        %641 = vmatpush1.xpose.msra.mxu0 0.0
        %642 = vmatprep.subr.mxu0 0.0
        %643 = vmatpush1.xpose.msra.mxu0 0.0
        %644 = vmatprep.subr.mxu0 0.0
        %645 = vmatpush1.xpose.msra.mxu0 0.0
        %646 = vmatprep.subr.mxu0 0.0
        %647 = vmatpush1.xpose.msra.mxu0 0.0
        %648 = vmatprep.subr.mxu0 0.0
        %649 = vmatpush1.xpose.msra.mxu0 0.0
        %650 = vmatprep.subr.mxu0 0.0
        %651 = vmatpush1.xpose.msra.mxu0 0.0
        %652 = vmatprep.subr.mxu0 0.0
        %653 = vmatpush1.xpose.msra.mxu0 0.0
        %654 = vmatprep.subr.mxu0 0.0
        %655 = vmatpush1.xpose.msra.mxu0 0.0
        %656 = vmatprep.subr.mxu0 0.0
        %657 = vmatpush1.xpose.msra.mxu0 0.0
        %658 = vmatprep.subr.mxu0 0.0
        %659 = vmatpush1.xpose.msra.mxu0 0.0
        %660 = vmatprep.subr.mxu0 0.0
        %661 = vmatpush1.xpose.msra.mxu0 0.0
        %662 = vmatprep.mubr.f32.mxu0 0.0
        %663 = vmatmul.mubr.f32.gmra.mrb[0].mxu0 %v593
        %v664 = vpop.f32.mrb[0].mxu0
        %v665 = vadd.f32 0.0, %v664
        %v666 = vpop.f32.mrb[0].mxu0
        %667 = vdwg.mxu0
        %v668 = vmul.f32 %v665, 0.35355338
        %v669 = vsel %vm591, %v668, -inf
        %670 = vmax.xlane.f32.xlu0 %v669
        %v671 = vpop.xlane.xlu0 %670
        %v672 = vsub.f32 %v668, %v671
        %v673 = vmul.f32 %v672, 1.442695
        %v674 = vpow.pop %v673
        %v675 = vsel %vm591, %v674, 0.0
        %676 = vadd.xlane.f32.xlu0 %v675
        %v677 = vpop.xlane.xlu0 %676
        %v678 = vrcp.pop %v677
        %v679 = vmul.f32 %v674, %v678
        %v681 = vsel %vm591, %v679, 0
        %683 = vmatprep.subr.mxu0 0.0
        %684 = vmatpush1.msra.mxu0 %v583
        %685 = vmatprep.subr.mxu0 0.0
        %686 = vmatpush1.msra.mxu0 0.0
        %687 = vmatprep.subr.mxu0 0.0
        %688 = vmatpush1.msra.mxu0 0.0
        %689 = vmatprep.subr.mxu0 0.0
        %690 = vmatpush1.msra.mxu0 0.0
        %691 = vmatprep.subr.mxu0 0.0
        %692 = vmatpush1.msra.mxu0 0.0
        %693 = vmatprep.subr.mxu0 0.0
        %694 = vmatpush1.msra.mxu0 0.0
        %695 = vmatprep.subr.mxu0 0.0
        %696 = vmatpush1.msra.mxu0 0.0
        %697 = vmatprep.subr.mxu0 0.0
        %698 = vmatpush1.msra.mxu0 0.0
        %699 = vmatprep.subr.mxu0 0.0
        %700 = vmatpush1.msra.mxu0 0.0
        %701 = vmatprep.subr.mxu0 0.0
        %702 = vmatpush1.msra.mxu0 0.0
        %703 = vmatprep.subr.mxu0 0.0
        %704 = vmatpush1.msra.mxu0 0.0
        %705 = vmatprep.subr.mxu0 0.0
        %706 = vmatpush1.msra.mxu0 0.0
        %707 = vmatprep.subr.mxu0 0.0
        %708 = vmatpush1.msra.mxu0 0.0
        %709 = vmatprep.subr.mxu0 0.0
        %710 = vmatpush1.msra.mxu0 0.0
        %711 = vmatprep.subr.mxu0 0.0
        %712 = vmatpush1.msra.mxu0 0.0
        %713 = vmatprep.subr.mxu0 0.0
        %714 = vmatpush1.msra.mxu0 0.0
        %715 = vmatprep.subr.mxu0 0.0
        %716 = vmatpush1.msra.mxu0 0.0
        %717 = vmatprep.subr.mxu0 0.0
        %718 = vmatpush1.msra.mxu0 0.0
        %719 = vmatprep.subr.mxu0 0.0
        %720 = vmatpush1.msra.mxu0 0.0
        %721 = vmatprep.subr.mxu0 0.0
        %722 = vmatpush1.msra.mxu0 0.0
        %723 = vmatprep.subr.mxu0 0.0
        %724 = vmatpush1.msra.mxu0 0.0
        %725 = vmatprep.subr.mxu0 0.0
        %726 = vmatpush1.msra.mxu0 0.0
        %727 = vmatprep.subr.mxu0 0.0
        %728 = vmatpush1.msra.mxu0 0.0
        %729 = vmatprep.subr.mxu0 0.0
        %730 = vmatpush1.msra.mxu0 0.0
        %731 = vmatprep.subr.mxu0 0.0
        %732 = vmatpush1.msra.mxu0 0.0
        %733 = vmatprep.subr.mxu0 0.0
        %734 = vmatpush1.msra.mxu0 0.0
        %735 = vmatprep.subr.mxu0 0.0
        %736 = vmatpush1.msra.mxu0 0.0
        %737 = vmatprep.subr.mxu0 0.0
        %738 = vmatpush1.msra.mxu0 0.0
        %739 = vmatprep.subr.mxu0 0.0
        %740 = vmatpush1.msra.mxu0 0.0
        %741 = vmatprep.subr.mxu0 0.0
        %742 = vmatpush1.msra.mxu0 0.0
        %743 = vmatprep.subr.mxu0 0.0
        %744 = vmatpush1.msra.mxu0 0.0
        %745 = vmatprep.subr.mxu0 0.0
        %746 = vmatpush1.msra.mxu0 0.0
        %747 = vmatprep.mubr.f32.mxu0 0.0
        %748 = vmatmul.mubr.f32.gmra.mrb[0].mxu0 %v681
        %v749 = vpop.f32.mrb[0].mxu0
        %v750 = vadd.f32 0.0, %v749
        %v751 = vpop.f32.mrb[0].mxu0
        %752 = vdwg.mxu0
        %753 = vrot.lane.b32.xlu0 %v411, 120
        %v754 = vpop.permute.xlu0 %753
        %755 = vrot.lane.b32.xlu0 %v497, 120
        %v756 = vpop.permute.xlu0 %755
        %v757 = vsel %vm591, %v754, 0
        %v759 = vsel %vm591, %v756, 0
        %761 = vmatprep.subr.mxu0 0.0
        %762 = vmatpush1.xpose.msra.mxu0 %v759
        %763 = vmatprep.subr.mxu0 0.0
        %764 = vmatpush1.xpose.msra.mxu0 0.0
        %765 = vmatprep.subr.mxu0 0.0
        %766 = vmatpush1.xpose.msra.mxu0 0.0
        %767 = vmatprep.subr.mxu0 0.0
        %768 = vmatpush1.xpose.msra.mxu0 0.0
        %769 = vmatprep.subr.mxu0 0.0
        %770 = vmatpush1.xpose.msra.mxu0 0.0
        %771 = vmatprep.subr.mxu0 0.0
        %772 = vmatpush1.xpose.msra.mxu0 0.0
        %773 = vmatprep.subr.mxu0 0.0
        %774 = vmatpush1.xpose.msra.mxu0 0.0
        %775 = vmatprep.subr.mxu0 0.0
        %776 = vmatpush1.xpose.msra.mxu0 0.0
        %777 = vmatprep.subr.mxu0 0.0
        %778 = vmatpush1.xpose.msra.mxu0 0.0
        %779 = vmatprep.subr.mxu0 0.0
        %780 = vmatpush1.xpose.msra.mxu0 0.0
        %781 = vmatprep.subr.mxu0 0.0
        %782 = vmatpush1.xpose.msra.mxu0 0.0
        %783 = vmatprep.subr.mxu0 0.0
        %784 = vmatpush1.xpose.msra.mxu0 0.0
        %785 = vmatprep.subr.mxu0 0.0
        %786 = vmatpush1.xpose.msra.mxu0 0.0
        %787 = vmatprep.subr.mxu0 0.0
        %788 = vmatpush1.xpose.msra.mxu0 0.0
        %789 = vmatprep.subr.mxu0 0.0
        %790 = vmatpush1.xpose.msra.mxu0 0.0
        %791 = vmatprep.subr.mxu0 0.0
        %792 = vmatpush1.xpose.msra.mxu0 0.0
        %793 = vmatprep.subr.mxu0 0.0
        %794 = vmatpush1.xpose.msra.mxu0 0.0
        %795 = vmatprep.subr.mxu0 0.0
        %796 = vmatpush1.xpose.msra.mxu0 0.0
        %797 = vmatprep.subr.mxu0 0.0
        %798 = vmatpush1.xpose.msra.mxu0 0.0
        %799 = vmatprep.subr.mxu0 0.0
        %800 = vmatpush1.xpose.msra.mxu0 0.0
        %801 = vmatprep.subr.mxu0 0.0
        %802 = vmatpush1.xpose.msra.mxu0 0.0
        %803 = vmatprep.subr.mxu0 0.0
        %804 = vmatpush1.xpose.msra.mxu0 0.0
        %805 = vmatprep.subr.mxu0 0.0
        %806 = vmatpush1.xpose.msra.mxu0 0.0
        %807 = vmatprep.subr.mxu0 0.0
        %808 = vmatpush1.xpose.msra.mxu0 0.0
        %809 = vmatprep.subr.mxu0 0.0
        %810 = vmatpush1.xpose.msra.mxu0 0.0
        %811 = vmatprep.subr.mxu0 0.0
        %812 = vmatpush1.xpose.msra.mxu0 0.0
        %813 = vmatprep.subr.mxu0 0.0
        %814 = vmatpush1.xpose.msra.mxu0 0.0
        %815 = vmatprep.subr.mxu0 0.0
        %816 = vmatpush1.xpose.msra.mxu0 0.0
        %817 = vmatprep.subr.mxu0 0.0
        %818 = vmatpush1.xpose.msra.mxu0 0.0
        %819 = vmatprep.subr.mxu0 0.0
        %820 = vmatpush1.xpose.msra.mxu0 0.0
        %821 = vmatprep.subr.mxu0 0.0
        %822 = vmatpush1.xpose.msra.mxu0 0.0
        %823 = vmatprep.subr.mxu0 0.0
        %824 = vmatpush1.xpose.msra.mxu0 0.0
        %825 = vmatprep.mubr.f32.mxu0 0.0
        %826 = vmatmul.mubr.f32.gmra.mrb[0].mxu0 %v757
        %v827 = vpop.f32.mrb[0].mxu0
        %v828 = vadd.f32 0.0, %v827
        %v829 = vpop.f32.mrb[0].mxu0
        %830 = vdwg.mxu0
        %v831 = vmul.f32 %v828, 0.35355338
        %v832 = vsel %vm591, %v831, -inf
        %833 = vmax.xlane.f32.xlu0 %v832
        %v834 = vpop.xlane.xlu0 %833
        %v835 = vsub.f32 %v831, %v834
        %v836 = vmul.f32 %v835, 1.442695
        %v837 = vpow.pop %v836
        %v838 = vsel %vm591, %v837, 0.0
        %839 = vadd.xlane.f32.xlu0 %v838
        %v840 = vpop.xlane.xlu0 %839
        %v841 = vrcp.pop %v840
        %v842 = vmul.f32 %v837, %v841
        %844 = vrot.lane.b32.xlu0 %v583, 120
        %v845 = vpop.permute.xlu0 %844
        %v848 = vsel %vm591, %v842, 0
        %850 = vmatprep.subr.mxu0 0.0
        %851 = vmatpush1.msra.mxu0 %v845
        %852 = vmatprep.subr.mxu0 0.0
        %853 = vmatpush1.msra.mxu0 0.0
        %854 = vmatprep.subr.mxu0 0.0
        %855 = vmatpush1.msra.mxu0 0.0
        %856 = vmatprep.subr.mxu0 0.0
        %857 = vmatpush1.msra.mxu0 0.0
        %858 = vmatprep.subr.mxu0 0.0
        %859 = vmatpush1.msra.mxu0 0.0
        %860 = vmatprep.subr.mxu0 0.0
        %861 = vmatpush1.msra.mxu0 0.0
        %862 = vmatprep.subr.mxu0 0.0
        %863 = vmatpush1.msra.mxu0 0.0
        %864 = vmatprep.subr.mxu0 0.0
        %865 = vmatpush1.msra.mxu0 0.0
        %866 = vmatprep.subr.mxu0 0.0
        %867 = vmatpush1.msra.mxu0 0.0
        %868 = vmatprep.subr.mxu0 0.0
        %869 = vmatpush1.msra.mxu0 0.0
        %870 = vmatprep.subr.mxu0 0.0
        %871 = vmatpush1.msra.mxu0 0.0
        %872 = vmatprep.subr.mxu0 0.0
        %873 = vmatpush1.msra.mxu0 0.0
        %874 = vmatprep.subr.mxu0 0.0
        %875 = vmatpush1.msra.mxu0 0.0
        %876 = vmatprep.subr.mxu0 0.0
        %877 = vmatpush1.msra.mxu0 0.0
        %878 = vmatprep.subr.mxu0 0.0
        %879 = vmatpush1.msra.mxu0 0.0
        %880 = vmatprep.subr.mxu0 0.0
        %881 = vmatpush1.msra.mxu0 0.0
        %882 = vmatprep.subr.mxu0 0.0
        %883 = vmatpush1.msra.mxu0 0.0
        %884 = vmatprep.subr.mxu0 0.0
        %885 = vmatpush1.msra.mxu0 0.0
        %886 = vmatprep.subr.mxu0 0.0
        %887 = vmatpush1.msra.mxu0 0.0
        %888 = vmatprep.subr.mxu0 0.0
        %889 = vmatpush1.msra.mxu0 0.0
        %890 = vmatprep.subr.mxu0 0.0
        %891 = vmatpush1.msra.mxu0 0.0
        %892 = vmatprep.subr.mxu0 0.0
        %893 = vmatpush1.msra.mxu0 0.0
        %894 = vmatprep.subr.mxu0 0.0
        %895 = vmatpush1.msra.mxu0 0.0
        %896 = vmatprep.subr.mxu0 0.0
        %897 = vmatpush1.msra.mxu0 0.0
        %898 = vmatprep.subr.mxu0 0.0
        %899 = vmatpush1.msra.mxu0 0.0
        %900 = vmatprep.subr.mxu0 0.0
        %901 = vmatpush1.msra.mxu0 0.0
        %902 = vmatprep.subr.mxu0 0.0
        %903 = vmatpush1.msra.mxu0 0.0
        %904 = vmatprep.subr.mxu0 0.0
        %905 = vmatpush1.msra.mxu0 0.0
        %906 = vmatprep.subr.mxu0 0.0
        %907 = vmatpush1.msra.mxu0 0.0
        %908 = vmatprep.subr.mxu0 0.0
        %909 = vmatpush1.msra.mxu0 0.0
        %910 = vmatprep.subr.mxu0 0.0
        %911 = vmatpush1.msra.mxu0 0.0
        %912 = vmatprep.subr.mxu0 0.0
        %913 = vmatpush1.msra.mxu0 0.0
        %914 = vmatprep.mubr.f32.mxu0 0.0
        %915 = vmatmul.mubr.f32.gmra.mrb[0].mxu0 %v848
        %v916 = vpop.f32.mrb[0].mxu0
        %v917 = vadd.f32 0.0, %v916
        %v918 = vpop.f32.mrb[0].mxu0
        %919 = vdwg.mxu0
        %v921 = vsel %vm591, %v917, 0
        %923 = vmatprep.subr.mxu0 0.0
        %924 = vmatpush1.msra.mxu0 %v588
        %925 = vmatprep.subr.mxu0 0.0
        %926 = vmatpush1.msra.mxu0 0.0
        %927 = vmatprep.subr.mxu0 0.0
        %928 = vmatpush1.msra.mxu0 0.0
        %929 = vmatprep.subr.mxu0 0.0
        %930 = vmatpush1.msra.mxu0 0.0
        %931 = vmatprep.subr.mxu0 0.0
        %932 = vmatpush1.msra.mxu0 0.0
        %933 = vmatprep.subr.mxu0 0.0
        %934 = vmatpush1.msra.mxu0 0.0
        %935 = vmatprep.subr.mxu0 0.0
        %936 = vmatpush1.msra.mxu0 0.0
        %937 = vmatprep.subr.mxu0 0.0
        %938 = vmatpush1.msra.mxu0 0.0
        %939 = vmatprep.subr.mxu0 0.0
        %940 = vmatpush1.msra.mxu0 0.0
        %941 = vmatprep.subr.mxu0 0.0
        %942 = vmatpush1.msra.mxu0 0.0
        %943 = vmatprep.subr.mxu0 0.0
        %944 = vmatpush1.msra.mxu0 0.0
        %945 = vmatprep.subr.mxu0 0.0
        %946 = vmatpush1.msra.mxu0 0.0
        %947 = vmatprep.subr.mxu0 0.0
        %948 = vmatpush1.msra.mxu0 0.0
        %949 = vmatprep.subr.mxu0 0.0
        %950 = vmatpush1.msra.mxu0 0.0
        %951 = vmatprep.subr.mxu0 0.0
        %952 = vmatpush1.msra.mxu0 0.0
        %953 = vmatprep.subr.mxu0 0.0
        %954 = vmatpush1.msra.mxu0 0.0
        %955 = vmatprep.subr.mxu0 0.0
        %956 = vmatpush1.msra.mxu0 0.0
        %957 = vmatprep.subr.mxu0 0.0
        %958 = vmatpush1.msra.mxu0 0.0
        %959 = vmatprep.subr.mxu0 0.0
        %960 = vmatpush1.msra.mxu0 0.0
        %961 = vmatprep.subr.mxu0 0.0
        %962 = vmatpush1.msra.mxu0 0.0
        %963 = vmatprep.subr.mxu0 0.0
        %964 = vmatpush1.msra.mxu0 0.0
        %965 = vmatprep.subr.mxu0 0.0
        %966 = vmatpush1.msra.mxu0 0.0
        %967 = vmatprep.subr.mxu0 0.0
        %968 = vmatpush1.msra.mxu0 0.0
        %969 = vmatprep.subr.mxu0 0.0
        %970 = vmatpush1.msra.mxu0 0.0
        %971 = vmatprep.subr.mxu0 0.0
        %972 = vmatpush1.msra.mxu0 0.0
        %973 = vmatprep.subr.mxu0 0.0
        %974 = vmatpush1.msra.mxu0 0.0
        %975 = vmatprep.subr.mxu0 0.0
        %976 = vmatpush1.msra.mxu0 0.0
        %977 = vmatprep.subr.mxu0 0.0
        %978 = vmatpush1.msra.mxu0 0.0
        %979 = vmatprep.subr.mxu0 0.0
        %980 = vmatpush1.msra.mxu0 0.0
        %981 = vmatprep.subr.mxu0 0.0
        %982 = vmatpush1.msra.mxu0 0.0
        %983 = vmatprep.subr.mxu0 0.0
        %984 = vmatpush1.msra.mxu0 0.0
        %985 = vmatprep.subr.mxu0 0.0
        %986 = vmatpush1.msra.mxu0 0.0
        %987 = vmatprep.mubr.f32.mxu0 0.0
        %988 = vmatmul.mubr.f32.gmra.mrb[0].mxu0 %v921
        %v989 = vpop.f32.mrb[0].mxu0
        %v990 = vadd.f32 0.0, %v989
        %v991 = vpop.f32.mrb[0].mxu0
        %992 = vdwg.mxu0
        %v994 = vsel %vm591, %v750, 0
        %996 = vmatprep.subr.mxu0 0.0
        %997 = vmatpush1.msra.mxu0 %v587
        %998 = vmatprep.subr.mxu0 0.0
        %999 = vmatpush1.msra.mxu0 0.0
        %1000 = vmatprep.subr.mxu0 0.0
        %1001 = vmatpush1.msra.mxu0 0.0
        %1002 = vmatprep.subr.mxu0 0.0
        %1003 = vmatpush1.msra.mxu0 0.0
        %1004 = vmatprep.subr.mxu0 0.0
        %1005 = vmatpush1.msra.mxu0 0.0
        %1006 = vmatprep.subr.mxu0 0.0
        %1007 = vmatpush1.msra.mxu0 0.0
        %1008 = vmatprep.subr.mxu0 0.0
        %1009 = vmatpush1.msra.mxu0 0.0
        %1010 = vmatprep.subr.mxu0 0.0
        %1011 = vmatpush1.msra.mxu0 0.0
        %1012 = vmatprep.subr.mxu0 0.0
        %1013 = vmatpush1.msra.mxu0 0.0
        %1014 = vmatprep.subr.mxu0 0.0
        %1015 = vmatpush1.msra.mxu0 0.0
        %1016 = vmatprep.subr.mxu0 0.0
        %1017 = vmatpush1.msra.mxu0 0.0
        %1018 = vmatprep.subr.mxu0 0.0
        %1019 = vmatpush1.msra.mxu0 0.0
        %1020 = vmatprep.subr.mxu0 0.0
        %1021 = vmatpush1.msra.mxu0 0.0
        %1022 = vmatprep.subr.mxu0 0.0
        %1023 = vmatpush1.msra.mxu0 0.0
        %1024 = vmatprep.subr.mxu0 0.0
        %1025 = vmatpush1.msra.mxu0 0.0
        %1026 = vmatprep.subr.mxu0 0.0
        %1027 = vmatpush1.msra.mxu0 0.0
        %1028 = vmatprep.subr.mxu0 0.0
        %1029 = vmatpush1.msra.mxu0 0.0
        %1030 = vmatprep.subr.mxu0 0.0
        %1031 = vmatpush1.msra.mxu0 0.0
        %1032 = vmatprep.subr.mxu0 0.0
        %1033 = vmatpush1.msra.mxu0 0.0
        %1034 = vmatprep.subr.mxu0 0.0
        %1035 = vmatpush1.msra.mxu0 0.0
        %1036 = vmatprep.subr.mxu0 0.0
        %1037 = vmatpush1.msra.mxu0 0.0
        %1038 = vmatprep.subr.mxu0 0.0
        %1039 = vmatpush1.msra.mxu0 0.0
        %1040 = vmatprep.subr.mxu0 0.0
        %1041 = vmatpush1.msra.mxu0 0.0
        %1042 = vmatprep.subr.mxu0 0.0
        %1043 = vmatpush1.msra.mxu0 0.0
        %1044 = vmatprep.subr.mxu0 0.0
        %1045 = vmatpush1.msra.mxu0 0.0
        %1046 = vmatprep.subr.mxu0 0.0
        %1047 = vmatpush1.msra.mxu0 0.0
        %1048 = vmatprep.subr.mxu0 0.0
        %1049 = vmatpush1.msra.mxu0 0.0
        %1050 = vmatprep.subr.mxu0 0.0
        %1051 = vmatpush1.msra.mxu0 0.0
        %1052 = vmatprep.subr.mxu0 0.0
        %1053 = vmatpush1.msra.mxu0 0.0
        %1054 = vmatprep.subr.mxu0 0.0
        %1055 = vmatpush1.msra.mxu0 0.0
        %1056 = vmatprep.subr.mxu0 0.0
        %1057 = vmatpush1.msra.mxu0 0.0
        %1058 = vmatprep.subr.mxu0 0.0
        %1059 = vmatpush1.msra.mxu0 0.0
        %1060 = vmatprep.mubr.f32.mxu0 0.0
        %1061 = vmatmul.mubr.f32.gmra.mrb[0].mxu0 %v994
        %v1062 = vpop.f32.mrb[0].mxu0
        %v1063 = vadd.f32 %v990, %v1062
        %v1064 = vpop.f32.mrb[0].mxu0
        %1065 = vdwg.mxu0
        %1066 = vrot.lane.b32.xlu0 %v411, 112
        %v1067 = vpop.permute.xlu0 %1066
        %1068 = vrot.lane.b32.xlu0 %v497, 112
        %v1069 = vpop.permute.xlu0 %1068
        %v1070 = vsel %vm591, %v1067, 0
        %v1072 = vsel %vm591, %v1069, 0
        %1074 = vmatprep.subr.mxu0 0.0
        %1075 = vmatpush1.xpose.msra.mxu0 %v1072
        %1076 = vmatprep.subr.mxu0 0.0
        %1077 = vmatpush1.xpose.msra.mxu0 0.0
        %1078 = vmatprep.subr.mxu0 0.0
        %1079 = vmatpush1.xpose.msra.mxu0 0.0
        %1080 = vmatprep.subr.mxu0 0.0
        %1081 = vmatpush1.xpose.msra.mxu0 0.0
        %1082 = vmatprep.subr.mxu0 0.0
        %1083 = vmatpush1.xpose.msra.mxu0 0.0
        %1084 = vmatprep.subr.mxu0 0.0
        %1085 = vmatpush1.xpose.msra.mxu0 0.0
        %1086 = vmatprep.subr.mxu0 0.0
        %1087 = vmatpush1.xpose.msra.mxu0 0.0
        %1088 = vmatprep.subr.mxu0 0.0
        %1089 = vmatpush1.xpose.msra.mxu0 0.0
        %1090 = vmatprep.subr.mxu0 0.0
        %1091 = vmatpush1.xpose.msra.mxu0 0.0
        %1092 = vmatprep.subr.mxu0 0.0
        %1093 = vmatpush1.xpose.msra.mxu0 0.0
        %1094 = vmatprep.subr.mxu0 0.0
        %1095 = vmatpush1.xpose.msra.mxu0 0.0
        %1096 = vmatprep.subr.mxu0 0.0
        %1097 = vmatpush1.xpose.msra.mxu0 0.0
        %1098 = vmatprep.subr.mxu0 0.0
        %1099 = vmatpush1.xpose.msra.mxu0 0.0
        %1100 = vmatprep.subr.mxu0 0.0
        %1101 = vmatpush1.xpose.msra.mxu0 0.0
        %1102 = vmatprep.subr.mxu0 0.0
        %1103 = vmatpush1.xpose.msra.mxu0 0.0
        %1104 = vmatprep.subr.mxu0 0.0
        %1105 = vmatpush1.xpose.msra.mxu0 0.0
        %1106 = vmatprep.subr.mxu0 0.0
        %1107 = vmatpush1.xpose.msra.mxu0 0.0
        %1108 = vmatprep.subr.mxu0 0.0
        %1109 = vmatpush1.xpose.msra.mxu0 0.0
        %1110 = vmatprep.subr.mxu0 0.0
        %1111 = vmatpush1.xpose.msra.mxu0 0.0
        %1112 = vmatprep.subr.mxu0 0.0
        %1113 = vmatpush1.xpose.msra.mxu0 0.0
        %1114 = vmatprep.subr.mxu0 0.0
        %1115 = vmatpush1.xpose.msra.mxu0 0.0
        %1116 = vmatprep.subr.mxu0 0.0
        %1117 = vmatpush1.xpose.msra.mxu0 0.0
        %1118 = vmatprep.subr.mxu0 0.0
        %1119 = vmatpush1.xpose.msra.mxu0 0.0
        %1120 = vmatprep.subr.mxu0 0.0
        %1121 = vmatpush1.xpose.msra.mxu0 0.0
        %1122 = vmatprep.subr.mxu0 0.0
        %1123 = vmatpush1.xpose.msra.mxu0 0.0
        %1124 = vmatprep.subr.mxu0 0.0
        %1125 = vmatpush1.xpose.msra.mxu0 0.0
        %1126 = vmatprep.subr.mxu0 0.0
        %1127 = vmatpush1.xpose.msra.mxu0 0.0
        %1128 = vmatprep.subr.mxu0 0.0
        %1129 = vmatpush1.xpose.msra.mxu0 0.0
        %1130 = vmatprep.subr.mxu0 0.0
        %1131 = vmatpush1.xpose.msra.mxu0 0.0
        %1132 = vmatprep.subr.mxu0 0.0
        %1133 = vmatpush1.xpose.msra.mxu0 0.0
        %1134 = vmatprep.subr.mxu0 0.0
        %1135 = vmatpush1.xpose.msra.mxu0 0.0
        %1136 = vmatprep.subr.mxu0 0.0
        %1137 = vmatpush1.xpose.msra.mxu0 0.0
        %1138 = vmatprep.mubr.f32.mxu0 0.0
        %1139 = vmatmul.mubr.f32.gmra.mrb[0].mxu0 %v1070
        %v1140 = vpop.f32.mrb[0].mxu0
        %v1141 = vadd.f32 0.0, %v1140
        %v1142 = vpop.f32.mrb[0].mxu0
        %1143 = vdwg.mxu0
        %v1144 = vmul.f32 %v1141, 0.35355338
        %v1145 = vsel %vm591, %v1144, -inf
        %1146 = vmax.xlane.f32.xlu0 %v1145
        %v1147 = vpop.xlane.xlu0 %1146
        %v1148 = vsub.f32 %v1144, %v1147
        %v1149 = vmul.f32 %v1148, 1.442695
        %v1150 = vpow.pop %v1149
        %v1151 = vsel %vm591, %v1150, 0.0
        %1152 = vadd.xlane.f32.xlu0 %v1151
        %v1153 = vpop.xlane.xlu0 %1152
        %v1154 = vrcp.pop %v1153
        %v1155 = vmul.f32 %v1150, %v1154
        %1156 = vrot.lane.b32.xlu0 %v583, 112
        %v1157 = vpop.permute.xlu0 %1156
        %v1160 = vsel %vm591, %v1155, 0
        %1162 = vmatprep.subr.mxu0 0.0
        %1163 = vmatpush1.msra.mxu0 %v1157
        %1164 = vmatprep.subr.mxu0 0.0
        %1165 = vmatpush1.msra.mxu0 0.0
        %1166 = vmatprep.subr.mxu0 0.0
        %1167 = vmatpush1.msra.mxu0 0.0
        %1168 = vmatprep.subr.mxu0 0.0
        %1169 = vmatpush1.msra.mxu0 0.0
        %1170 = vmatprep.subr.mxu0 0.0
        %1171 = vmatpush1.msra.mxu0 0.0
        %1172 = vmatprep.subr.mxu0 0.0
        %1173 = vmatpush1.msra.mxu0 0.0
        %1174 = vmatprep.subr.mxu0 0.0
        %1175 = vmatpush1.msra.mxu0 0.0
        %1176 = vmatprep.subr.mxu0 0.0
        %1177 = vmatpush1.msra.mxu0 0.0
        %1178 = vmatprep.subr.mxu0 0.0
        %1179 = vmatpush1.msra.mxu0 0.0
        %1180 = vmatprep.subr.mxu0 0.0
        %1181 = vmatpush1.msra.mxu0 0.0
        %1182 = vmatprep.subr.mxu0 0.0
        %1183 = vmatpush1.msra.mxu0 0.0
        %1184 = vmatprep.subr.mxu0 0.0
        %1185 = vmatpush1.msra.mxu0 0.0
        %1186 = vmatprep.subr.mxu0 0.0
        %1187 = vmatpush1.msra.mxu0 0.0
        %1188 = vmatprep.subr.mxu0 0.0
        %1189 = vmatpush1.msra.mxu0 0.0
        %1190 = vmatprep.subr.mxu0 0.0
        %1191 = vmatpush1.msra.mxu0 0.0
        %1192 = vmatprep.subr.mxu0 0.0
        %1193 = vmatpush1.msra.mxu0 0.0
        %1194 = vmatprep.subr.mxu0 0.0
        %1195 = vmatpush1.msra.mxu0 0.0
        %1196 = vmatprep.subr.mxu0 0.0
        %1197 = vmatpush1.msra.mxu0 0.0
        %1198 = vmatprep.subr.mxu0 0.0
        %1199 = vmatpush1.msra.mxu0 0.0
        %1200 = vmatprep.subr.mxu0 0.0
        %1201 = vmatpush1.msra.mxu0 0.0
        %1202 = vmatprep.subr.mxu0 0.0
        %1203 = vmatpush1.msra.mxu0 0.0
        %1204 = vmatprep.subr.mxu0 0.0
        %1205 = vmatpush1.msra.mxu0 0.0
        %1206 = vmatprep.subr.mxu0 0.0
        %1207 = vmatpush1.msra.mxu0 0.0
        %1208 = vmatprep.subr.mxu0 0.0
        %1209 = vmatpush1.msra.mxu0 0.0
        %1210 = vmatprep.subr.mxu0 0.0
        %1211 = vmatpush1.msra.mxu0 0.0
        %1212 = vmatprep.subr.mxu0 0.0
        %1213 = vmatpush1.msra.mxu0 0.0
        %1214 = vmatprep.subr.mxu0 0.0
        %1215 = vmatpush1.msra.mxu0 0.0
        %1216 = vmatprep.subr.mxu0 0.0
        %1217 = vmatpush1.msra.mxu0 0.0
        %1218 = vmatprep.subr.mxu0 0.0
        %1219 = vmatpush1.msra.mxu0 0.0
        %1220 = vmatprep.subr.mxu0 0.0
        %1221 = vmatpush1.msra.mxu0 0.0
        %1222 = vmatprep.subr.mxu0 0.0
        %1223 = vmatpush1.msra.mxu0 0.0
        %1224 = vmatprep.subr.mxu0 0.0
        %1225 = vmatpush1.msra.mxu0 0.0
        %1226 = vmatprep.mubr.f32.mxu0 0.0
        %1227 = vmatmul.mubr.f32.gmra.mrb[0].mxu0 %v1160
        %v1228 = vpop.f32.mrb[0].mxu0
        %v1229 = vadd.f32 0.0, %v1228
        %v1230 = vpop.f32.mrb[0].mxu0
        %1231 = vdwg.mxu0
        %v1233 = vsel %vm591, %v1229, 0
        %1235 = vmatprep.subr.mxu0 0.0
        %1236 = vmatpush1.msra.mxu0 %v589
        %1237 = vmatprep.subr.mxu0 0.0
        %1238 = vmatpush1.msra.mxu0 0.0
        %1239 = vmatprep.subr.mxu0 0.0
        %1240 = vmatpush1.msra.mxu0 0.0
        %1241 = vmatprep.subr.mxu0 0.0
        %1242 = vmatpush1.msra.mxu0 0.0
        %1243 = vmatprep.subr.mxu0 0.0
        %1244 = vmatpush1.msra.mxu0 0.0
        %1245 = vmatprep.subr.mxu0 0.0
        %1246 = vmatpush1.msra.mxu0 0.0
        %1247 = vmatprep.subr.mxu0 0.0
        %1248 = vmatpush1.msra.mxu0 0.0
        %1249 = vmatprep.subr.mxu0 0.0
        %1250 = vmatpush1.msra.mxu0 0.0
        %1251 = vmatprep.subr.mxu0 0.0
        %1252 = vmatpush1.msra.mxu0 0.0
        %1253 = vmatprep.subr.mxu0 0.0
        %1254 = vmatpush1.msra.mxu0 0.0
        %1255 = vmatprep.subr.mxu0 0.0
        %1256 = vmatpush1.msra.mxu0 0.0
        %1257 = vmatprep.subr.mxu0 0.0
        %1258 = vmatpush1.msra.mxu0 0.0
        %1259 = vmatprep.subr.mxu0 0.0
        %1260 = vmatpush1.msra.mxu0 0.0
        %1261 = vmatprep.subr.mxu0 0.0
        %1262 = vmatpush1.msra.mxu0 0.0
        %1263 = vmatprep.subr.mxu0 0.0
        %1264 = vmatpush1.msra.mxu0 0.0
        %1265 = vmatprep.subr.mxu0 0.0
        %1266 = vmatpush1.msra.mxu0 0.0
        %1267 = vmatprep.subr.mxu0 0.0
        %1268 = vmatpush1.msra.mxu0 0.0
        %1269 = vmatprep.subr.mxu0 0.0
        %1270 = vmatpush1.msra.mxu0 0.0
        %1271 = vmatprep.subr.mxu0 0.0
        %1272 = vmatpush1.msra.mxu0 0.0
        %1273 = vmatprep.subr.mxu0 0.0
        %1274 = vmatpush1.msra.mxu0 0.0
        %1275 = vmatprep.subr.mxu0 0.0
        %1276 = vmatpush1.msra.mxu0 0.0
        %1277 = vmatprep.subr.mxu0 0.0
        %1278 = vmatpush1.msra.mxu0 0.0
        %1279 = vmatprep.subr.mxu0 0.0
        %1280 = vmatpush1.msra.mxu0 0.0
        %1281 = vmatprep.subr.mxu0 0.0
        %1282 = vmatpush1.msra.mxu0 0.0
        %1283 = vmatprep.subr.mxu0 0.0
        %1284 = vmatpush1.msra.mxu0 0.0
        %1285 = vmatprep.subr.mxu0 0.0
        %1286 = vmatpush1.msra.mxu0 0.0
        %1287 = vmatprep.subr.mxu0 0.0
        %1288 = vmatpush1.msra.mxu0 0.0
        %1289 = vmatprep.subr.mxu0 0.0
        %1290 = vmatpush1.msra.mxu0 0.0
        %1291 = vmatprep.subr.mxu0 0.0
        %1292 = vmatpush1.msra.mxu0 0.0
        %1293 = vmatprep.subr.mxu0 0.0
        %1294 = vmatpush1.msra.mxu0 0.0
        %1295 = vmatprep.subr.mxu0 0.0
        %1296 = vmatpush1.msra.mxu0 0.0
        %1297 = vmatprep.subr.mxu0 0.0
        %1298 = vmatpush1.msra.mxu0 0.0
        %1299 = vmatprep.mubr.f32.mxu0 0.0
        %1300 = vmatmul.mubr.f32.gmra.mrb[0].mxu0 %v1233
        %v1301 = vpop.f32.mrb[0].mxu0
        %v1302 = vadd.f32 0.0, %v1301
        %v1303 = vpop.f32.mrb[0].mxu0
        %1304 = vdwg.mxu0
        %v1305 = vadd.f32 %v1063, %v1302
        %1306 = vrot.lane.b32.xlu0 %v411, 104
        %v1307 = vpop.permute.xlu0 %1306
        %1308 = vrot.lane.b32.xlu0 %v497, 104
        %v1309 = vpop.permute.xlu0 %1308
        %v1310 = vsel %vm591, %v1307, 0
        %v1312 = vsel %vm591, %v1309, 0
        %1314 = vmatprep.subr.mxu0 0.0
        %1315 = vmatpush1.xpose.msra.mxu0 %v1312
        %1316 = vmatprep.subr.mxu0 0.0
        %1317 = vmatpush1.xpose.msra.mxu0 0.0
        %1318 = vmatprep.subr.mxu0 0.0
        %1319 = vmatpush1.xpose.msra.mxu0 0.0
        %1320 = vmatprep.subr.mxu0 0.0
        %1321 = vmatpush1.xpose.msra.mxu0 0.0
        %1322 = vmatprep.subr.mxu0 0.0
        %1323 = vmatpush1.xpose.msra.mxu0 0.0
        %1324 = vmatprep.subr.mxu0 0.0
        %1325 = vmatpush1.xpose.msra.mxu0 0.0
        %1326 = vmatprep.subr.mxu0 0.0
        %1327 = vmatpush1.xpose.msra.mxu0 0.0
        %1328 = vmatprep.subr.mxu0 0.0
        %1329 = vmatpush1.xpose.msra.mxu0 0.0
        %1330 = vmatprep.subr.mxu0 0.0
        %1331 = vmatpush1.xpose.msra.mxu0 0.0
        %1332 = vmatprep.subr.mxu0 0.0
        %1333 = vmatpush1.xpose.msra.mxu0 0.0
        %1334 = vmatprep.subr.mxu0 0.0
        %1335 = vmatpush1.xpose.msra.mxu0 0.0
        %1336 = vmatprep.subr.mxu0 0.0
        %1337 = vmatpush1.xpose.msra.mxu0 0.0
        %1338 = vmatprep.subr.mxu0 0.0
        %1339 = vmatpush1.xpose.msra.mxu0 0.0
        %1340 = vmatprep.subr.mxu0 0.0
        %1341 = vmatpush1.xpose.msra.mxu0 0.0
        %1342 = vmatprep.subr.mxu0 0.0
        %1343 = vmatpush1.xpose.msra.mxu0 0.0
        %1344 = vmatprep.subr.mxu0 0.0
        %1345 = vmatpush1.xpose.msra.mxu0 0.0
        %1346 = vmatprep.subr.mxu0 0.0
        %1347 = vmatpush1.xpose.msra.mxu0 0.0
        %1348 = vmatprep.subr.mxu0 0.0
        %1349 = vmatpush1.xpose.msra.mxu0 0.0
        %1350 = vmatprep.subr.mxu0 0.0
        %1351 = vmatpush1.xpose.msra.mxu0 0.0
        %1352 = vmatprep.subr.mxu0 0.0
        %1353 = vmatpush1.xpose.msra.mxu0 0.0
        %1354 = vmatprep.subr.mxu0 0.0
        %1355 = vmatpush1.xpose.msra.mxu0 0.0
        %1356 = vmatprep.subr.mxu0 0.0
        %1357 = vmatpush1.xpose.msra.mxu0 0.0
        %1358 = vmatprep.subr.mxu0 0.0
        %1359 = vmatpush1.xpose.msra.mxu0 0.0
        %1360 = vmatprep.subr.mxu0 0.0
        %1361 = vmatpush1.xpose.msra.mxu0 0.0
        %1362 = vmatprep.subr.mxu0 0.0
        %1363 = vmatpush1.xpose.msra.mxu0 0.0
        %1364 = vmatprep.subr.mxu0 0.0
        %1365 = vmatpush1.xpose.msra.mxu0 0.0
        %1366 = vmatprep.subr.mxu0 0.0
        %1367 = vmatpush1.xpose.msra.mxu0 0.0
        %1368 = vmatprep.subr.mxu0 0.0
        %1369 = vmatpush1.xpose.msra.mxu0 0.0
        %1370 = vmatprep.subr.mxu0 0.0
        %1371 = vmatpush1.xpose.msra.mxu0 0.0
        %1372 = vmatprep.subr.mxu0 0.0
        %1373 = vmatpush1.xpose.msra.mxu0 0.0
        %1374 = vmatprep.subr.mxu0 0.0
        %1375 = vmatpush1.xpose.msra.mxu0 0.0
        %1376 = vmatprep.subr.mxu0 0.0
        %1377 = vmatpush1.xpose.msra.mxu0 0.0
        %1378 = vmatprep.mubr.f32.mxu0 0.0
        %1379 = vmatmul.mubr.f32.gmra.mrb[0].mxu0 %v1310
        %v1380 = vpop.f32.mrb[0].mxu0
        %v1381 = vadd.f32 0.0, %v1380
        %v1382 = vpop.f32.mrb[0].mxu0
        %1383 = vdwg.mxu0
        %v1384 = vmul.f32 %v1381, 0.35355338
        %v1385 = vsel %vm591, %v1384, -inf
        %1386 = vmax.xlane.f32.xlu0 %v1385
        %v1387 = vpop.xlane.xlu0 %1386
        %v1388 = vsub.f32 %v1384, %v1387
        %v1389 = vmul.f32 %v1388, 1.442695
        %v1390 = vpow.pop %v1389
        %v1391 = vsel %vm591, %v1390, 0.0
        %1392 = vadd.xlane.f32.xlu0 %v1391
        %v1393 = vpop.xlane.xlu0 %1392
        %v1394 = vrcp.pop %v1393
        %v1395 = vmul.f32 %v1390, %v1394
        %1396 = vrot.lane.b32.xlu0 %v583, 104
        %v1397 = vpop.permute.xlu0 %1396
        %v1400 = vsel %vm591, %v1395, 0
        %1402 = vmatprep.subr.mxu0 0.0
        %1403 = vmatpush1.msra.mxu0 %v1397
        %1404 = vmatprep.subr.mxu0 0.0
        %1405 = vmatpush1.msra.mxu0 0.0
        %1406 = vmatprep.subr.mxu0 0.0
        %1407 = vmatpush1.msra.mxu0 0.0
        %1408 = vmatprep.subr.mxu0 0.0
        %1409 = vmatpush1.msra.mxu0 0.0
        %1410 = vmatprep.subr.mxu0 0.0
        %1411 = vmatpush1.msra.mxu0 0.0
        %1412 = vmatprep.subr.mxu0 0.0
        %1413 = vmatpush1.msra.mxu0 0.0
        %1414 = vmatprep.subr.mxu0 0.0
        %1415 = vmatpush1.msra.mxu0 0.0
        %1416 = vmatprep.subr.mxu0 0.0
        %1417 = vmatpush1.msra.mxu0 0.0
        %1418 = vmatprep.subr.mxu0 0.0
        %1419 = vmatpush1.msra.mxu0 0.0
        %1420 = vmatprep.subr.mxu0 0.0
        %1421 = vmatpush1.msra.mxu0 0.0
        %1422 = vmatprep.subr.mxu0 0.0
        %1423 = vmatpush1.msra.mxu0 0.0
        %1424 = vmatprep.subr.mxu0 0.0
        %1425 = vmatpush1.msra.mxu0 0.0
        %1426 = vmatprep.subr.mxu0 0.0
        %1427 = vmatpush1.msra.mxu0 0.0
        %1428 = vmatprep.subr.mxu0 0.0
        %1429 = vmatpush1.msra.mxu0 0.0
        %1430 = vmatprep.subr.mxu0 0.0
        %1431 = vmatpush1.msra.mxu0 0.0
        %1432 = vmatprep.subr.mxu0 0.0
        %1433 = vmatpush1.msra.mxu0 0.0
        %1434 = vmatprep.subr.mxu0 0.0
        %1435 = vmatpush1.msra.mxu0 0.0
        %1436 = vmatprep.subr.mxu0 0.0
        %1437 = vmatpush1.msra.mxu0 0.0
        %1438 = vmatprep.subr.mxu0 0.0
        %1439 = vmatpush1.msra.mxu0 0.0
        %1440 = vmatprep.subr.mxu0 0.0
        %1441 = vmatpush1.msra.mxu0 0.0
        %1442 = vmatprep.subr.mxu0 0.0
        %1443 = vmatpush1.msra.mxu0 0.0
        %1444 = vmatprep.subr.mxu0 0.0
        %1445 = vmatpush1.msra.mxu0 0.0
        %1446 = vmatprep.subr.mxu0 0.0
        %1447 = vmatpush1.msra.mxu0 0.0
        %1448 = vmatprep.subr.mxu0 0.0
        %1449 = vmatpush1.msra.mxu0 0.0
        %1450 = vmatprep.subr.mxu0 0.0
        %1451 = vmatpush1.msra.mxu0 0.0
        %1452 = vmatprep.subr.mxu0 0.0
        %1453 = vmatpush1.msra.mxu0 0.0
        %1454 = vmatprep.subr.mxu0 0.0
        %1455 = vmatpush1.msra.mxu0 0.0
        %1456 = vmatprep.subr.mxu0 0.0
        %1457 = vmatpush1.msra.mxu0 0.0
        %1458 = vmatprep.subr.mxu0 0.0
        %1459 = vmatpush1.msra.mxu0 0.0
        %1460 = vmatprep.subr.mxu0 0.0
        %1461 = vmatpush1.msra.mxu0 0.0
        %1462 = vmatprep.subr.mxu0 0.0
        %1463 = vmatpush1.msra.mxu0 0.0
        %1464 = vmatprep.subr.mxu0 0.0
        %1465 = vmatpush1.msra.mxu0 0.0
        %1466 = vmatprep.mubr.f32.mxu0 0.0
        %1467 = vmatmul.mubr.f32.gmra.mrb[0].mxu0 %v1400
        %v1468 = vpop.f32.mrb[0].mxu0
        %v1469 = vadd.f32 0.0, %v1468
        %v1470 = vpop.f32.mrb[0].mxu0
        %1471 = vdwg.mxu0
        %v1473 = vsel %vm591, %v1469, 0
        %1475 = vmatprep.subr.mxu0 0.0
        %1476 = vmatpush1.msra.mxu0 %v590
        %1477 = vmatprep.subr.mxu0 0.0
        %1478 = vmatpush1.msra.mxu0 0.0
        %1479 = vmatprep.subr.mxu0 0.0
        %1480 = vmatpush1.msra.mxu0 0.0
        %1481 = vmatprep.subr.mxu0 0.0
        %1482 = vmatpush1.msra.mxu0 0.0
        %1483 = vmatprep.subr.mxu0 0.0
        %1484 = vmatpush1.msra.mxu0 0.0
        %1485 = vmatprep.subr.mxu0 0.0
        %1486 = vmatpush1.msra.mxu0 0.0
        %1487 = vmatprep.subr.mxu0 0.0
        %1488 = vmatpush1.msra.mxu0 0.0
        %1489 = vmatprep.subr.mxu0 0.0
        %1490 = vmatpush1.msra.mxu0 0.0
        %1491 = vmatprep.subr.mxu0 0.0
        %1492 = vmatpush1.msra.mxu0 0.0
        %1493 = vmatprep.subr.mxu0 0.0
        %1494 = vmatpush1.msra.mxu0 0.0
        %1495 = vmatprep.subr.mxu0 0.0
        %1496 = vmatpush1.msra.mxu0 0.0
        %1497 = vmatprep.subr.mxu0 0.0
        %1498 = vmatpush1.msra.mxu0 0.0
        %1499 = vmatprep.subr.mxu0 0.0
        %1500 = vmatpush1.msra.mxu0 0.0
        %1501 = vmatprep.subr.mxu0 0.0
        %1502 = vmatpush1.msra.mxu0 0.0
        %1503 = vmatprep.subr.mxu0 0.0
        %1504 = vmatpush1.msra.mxu0 0.0
        %1505 = vmatprep.subr.mxu0 0.0
        %1506 = vmatpush1.msra.mxu0 0.0
        %1507 = vmatprep.subr.mxu0 0.0
        %1508 = vmatpush1.msra.mxu0 0.0
        %1509 = vmatprep.subr.mxu0 0.0
        %1510 = vmatpush1.msra.mxu0 0.0
        %1511 = vmatprep.subr.mxu0 0.0
        %1512 = vmatpush1.msra.mxu0 0.0
        %1513 = vmatprep.subr.mxu0 0.0
        %1514 = vmatpush1.msra.mxu0 0.0
        %1515 = vmatprep.subr.mxu0 0.0
        %1516 = vmatpush1.msra.mxu0 0.0
        %1517 = vmatprep.subr.mxu0 0.0
        %1518 = vmatpush1.msra.mxu0 0.0
        %1519 = vmatprep.subr.mxu0 0.0
        %1520 = vmatpush1.msra.mxu0 0.0
        %1521 = vmatprep.subr.mxu0 0.0
        %1522 = vmatpush1.msra.mxu0 0.0
        %1523 = vmatprep.subr.mxu0 0.0
        %1524 = vmatpush1.msra.mxu0 0.0
        %1525 = vmatprep.subr.mxu0 0.0
        %1526 = vmatpush1.msra.mxu0 0.0
        %1527 = vmatprep.subr.mxu0 0.0
        %1528 = vmatpush1.msra.mxu0 0.0
        %1529 = vmatprep.subr.mxu0 0.0
        %1530 = vmatpush1.msra.mxu0 0.0
        %1531 = vmatprep.subr.mxu0 0.0
        %1532 = vmatpush1.msra.mxu0 0.0
        %1533 = vmatprep.subr.mxu0 0.0
        %1534 = vmatpush1.msra.mxu0 0.0
        %1535 = vmatprep.subr.mxu0 0.0
        %1536 = vmatpush1.msra.mxu0 0.0
        %1537 = vmatprep.subr.mxu0 0.0
        %1538 = vmatpush1.msra.mxu0 0.0
        %1539 = vmatprep.mubr.f32.mxu0 0.0
        %1540 = vmatmul.mubr.f32.gmra.mrb[0].mxu0 %v1473
        %v1541 = vpop.f32.mrb[0].mxu0
        %v1542 = vadd.f32 0.0, %v1541
        %v1543 = vpop.f32.mrb[0].mxu0
        %1544 = vdwg.mxu0
        %v1545 = vadd.f32 %v1305, %v1542
        %s1546 = scalar_lea.vmem %s4, 3
        %v1547 = vld [vmem:[%s1546] sm:$0x1]
        %v1549 = vlaneseq
        %v1550 = vshrl.u32 %v1549, 7
        %v1551 = vsub.s32 0, %v1550
        %v1552 = vrot.slane %v1547, %v1551
        %v1554 = vadd.f32 %v1545, %v1552
        %1555 = vst.msk [vmem:[%s325] sm:$0xff] %vm340, %v1554
        %s1556 = sand.u32 %s154, 1
        %s1557 = scalar_lea.sflag [#allocation4], %s1556
        %s1558 = sand.u32 %s154, 1
        %s1559 = smul.addr %s1558, 8
        %s1560 = scalar_lea.vmem [#allocation10], %s1559
        // Predicated region
        $region57: #{tpu_custom_call.1} parent=39 // pred_check
          %p1561 = pneg %p164
        $region58: #{tpu_custom_call.1} parent=39 // pred_check_branch
          %1563 = sbr.rel (%p1561) target = $region60
        $region59: #{tpu_custom_call.1} parent=39 // pred_region
          %s1565 = ssub.s32 128, 128
          %1566 = vsyncadd %s1557, %s1565
          %s1567 = smul.addr %s26, 128
          %s1568 = scalar_lea.hbm %s5, %s1567
          %s1570 = sshll.u32 %s1560, 4
          %s1571 = int_to_ptr.vmem [resolvable:$true] %s1570
          %1573 = dma.vmem_to_hbm [thread:$0]  %s1571, 128, %s1568, %s1557
        $region60: #{tpu_custom_call.1} parent=39 // pred_fallthru
          _
      $region40: #{tpu_custom_call.1} parent=5 // pred_fallthru
        _
      %p1574 = scmp.le.s32.totalorder 2, %s21
      // Predicated region
      $region61: #{tpu_custom_call.1} parent=5 // pred_check
        %p1575 = pneg %p1574
      $region62: #{tpu_custom_call.1} parent=5 // pred_check_branch
        %1577 = sbr.rel (%p1575) target = $region64
      $region63: #{tpu_custom_call.1} parent=5 // pred_region
        %s1578 = ssub.s32 %s21, 2
        // Predicated region
        $region65: #{tpu_custom_call.1} parent=63 // pred_check
          %p1579 = pneg %p170
        $region66: #{tpu_custom_call.1} parent=63 // pred_check_branch
          %1581 = sbr.rel (%p1579) target = $region68
        $region67: #{tpu_custom_call.1} parent=63 // pred_region
          %s1582 = sand.u32 %s155, 1
          %s1583 = scalar_lea.sflag [#allocation4], %s1582
          %s1584 = sand.u32 %s155, 1
          %s1585 = smul.addr %s1584, 8
          %s1586 = scalar_lea.vmem [#allocation10], %s1585
          %1587 = dma.done %s1583, 128
        $region68: #{tpu_custom_call.1} parent=63 // pred_fallthru
          _
      $region64: #{tpu_custom_call.1} parent=5 // pred_fallthru
        _
    $region6: #{tpu_custom_call.1} parent=1 // loop_footer
      %s25 = sadd.s32 1, %s21
    $region7: #{tpu_custom_call.1} parent=1 // loop_footer_branch
      %20 = sbr.rel target = $region3
    $region8: #{tpu_custom_call.1} parent=1 // loop_exit
      _
    %1588 = vsyncpa [#allocation3], 1
    %s1589 = scalar_lea.sflag [#allocation3], 1
    %1590 = vsyncpa %s1589, 1
    %1591 = vsyncpa [#allocation6], 1
    %s1592 = scalar_lea.sflag [#allocation6], 1
    %1593 = vsyncpa %s1592, 1
    %1594 = vsyncpa [#allocation9], 1
    %1595 = vsyncpa [#allocation4], 1
    %s1596 = scalar_lea.sflag [#allocation4], 1
    %1597 = vsyncpa %s1596, 1

</llo_original>
